<compile_context>
chip_gen: v5e
topology: v5e:2x2
jax: 0.10.0
libtpu: 0.0.40
codegen_flags: <defaults>
</compile_context>

<pallas_src>
import math

import jax
import jax.numpy as jnp
from jax import lax
from jax.experimental import pallas as pl
from jax.experimental.pallas import tpu as pltpu

# ---------------------------------------------------------------------------
# Model dims (from ludo_simple.__init__)
# ---------------------------------------------------------------------------
D_IN, D_H1, D_H2, D_H3 = 1152, 288, 72, 18
D_V, D_PI = 1, 4
D_OUT_PAD = 128            # lane-dense output slab: [ v | pi | zero padding ]


# ---------------------------------------------------------------------------
# Pallas kernel: full MLP forward for one batch tile.
# Weights / biases are tiny and stay resident in VMEM as full blocks with
# constant index maps.  Value and policy heads are fused into one (18, 128)
# lane-dense matmul so the output store is an unmasked 128-lane vst and there
# is only one output pipeline.
# ---------------------------------------------------------------------------
def ludo_mlp_kernel(x_ref,
                    w0_ref, b0_ref,
                    w1_ref, b1_ref,
                    w2_ref, b2_ref,
                    wh_ref, bh_ref,
                    out_ref):
    x = x_ref[...]                                            # (tb, 1152)

    # layer 0: 1152 -> 288, relu.  Dominant matmul: operands cast to w0's dtype
    # (bf16 when prepared with use_bf16=True -> native MXU path), f32 accum.
    x1 = jnp.dot(x.astype(w0_ref.dtype), w0_ref[...],
                 preferred_element_type=jnp.float32)
    x1 = jnp.maximum(x1 + b0_ref[...], 0.0)

    # layer 1: 288 -> 72, relu
    x2 = jnp.dot(x1, w1_ref[...], preferred_element_type=jnp.float32)
    x2 = jnp.maximum(x2 + b1_ref[...], 0.0)

    # layer 2: 72 -> 18, relu
    x3 = jnp.dot(x2, w2_ref[...], preferred_element_type=jnp.float32)
    x3 = jnp.maximum(x3 + b2_ref[...], 0.0)

    # fused heads: one matmul; col 0 = value (ReLU), cols 1..4 = policy (NO ReLU),
    # cols 5..127 = exact zeros from the padded weights/bias.
    h = jnp.dot(x3, wh_ref[...], preferred_element_type=jnp.float32) + bh_ref[...]
    col = lax.broadcasted_iota(jnp.int32, h.shape, 1)
    h = jnp.where(col == 0, jnp.maximum(h, 0.0), h)

    out_ref[...] = h.astype(out_ref.dtype)


def _round_up(n, m):
    return ((n + m - 1) // m) * m


def _choose_tb(B, tb_max, min_grid_steps):
    """Batch tile: multiple of 8 (sublanes), capped by tb_max, sized so that
    (a) padding waste in the partial last block is small and
    (b) the grid has >= min_grid_steps steps when B allows it (v7x megacore)."""
    tb = min(tb_max,
             _round_up(B, 8),
             _round_up(pl.cdiv(B, max(1, min_grid_steps)), 8))
    return max(8, _round_up(tb, 8))


# ---------------------------------------------------------------------------
# One-time parameter preparation (hoisted out of the per-call wrapper):
# fuse the tiny value/policy heads into a lane-dense (18, 128) weight + bias,
# and cast w0 to bf16 for the MXU fast path.
# ---------------------------------------------------------------------------
def prepare_params(params, *, use_bf16=True):
    (w0, b0), (w1, b1), (w2, b2), (w3, b3), (w4, b4) = params

    wh = jnp.zeros((D_H3, D_OUT_PAD), jnp.float32)
    wh = wh.at[:, :D_V].set(w3).at[:, D_V:D_V + D_PI].set(w4)
    bh = jnp.zeros((1, D_OUT_PAD), jnp.float32)
    bh = bh.at[:, :D_V].set(b3).at[:, D_V:D_V + D_PI].set(b4)

    # use_bf16=True is the recommended (and v5e-mandatory) fast path; with f32
    # MXU operands the 1152->288 matmul can flip the kernel compute-bound on v5e.
    w0 = w0.astype(jnp.bfloat16 if use_bf16 else jnp.float32)

    return (w0,
            jnp.asarray(b0, jnp.float32),
            jnp.asarray(w1, jnp.float32), jnp.asarray(b1, jnp.float32),
            jnp.asarray(w2, jnp.float32), jnp.asarray(b2, jnp.float32),
            wh, bh)


def ludo_simple_forward(x, prepared, *, tb=512, min_grid_steps=2,
                        out_dtype=jnp.float32):
    """x: (B, 1152) float32 or bfloat16.  prepared: output of prepare_params().
    Returns (v: (B, 1), pi: (B, 4)) in out_dtype (default f32)."""
    B = x.shape[0]
    w0, b0, w1, b1, w2, b2, wh, bh = prepared

    if B == 0:
        return (jnp.zeros((0, D_V), out_dtype), jnp.zeros((0, D_PI), out_dtype))

    tb = _choose_tb(B, int(tb), int(min_grid_steps))
    grid = (pl.cdiv(B, tb),)          # partial last block masked by Pallas

    def full_spec(arr):
        # Whole (2-D) array as one resident block; constant index map so it is
        # fetched once and not re-DMA'd per grid step.
        return pl.BlockSpec(arr.shape, lambda i: (0, 0))

    in_specs = [
        pl.BlockSpec((tb, D_IN), lambda i: (i, 0)),   # x: tiled & pipelined over batch
        full_spec(w0), full_spec(b0),
        full_spec(w1), full_spec(b1),
        full_spec(w2), full_spec(b2),
        full_spec(wh), full_spec(bh),
    ]
    out_specs = pl.BlockSpec((tb, D_OUT_PAD), lambda i: (i, 0))
    out_shape = jax.ShapeDtypeStruct((B, D_OUT_PAD), out_dtype)

    # VMEM budget: double-buffered x + double-buffered out + resident weights
    # + f32 intermediates + margin.  Clamp to [32 MiB, 48 MiB] so large tiles
    # still fit v7x's 64 MiB physical VMEM with headroom.
    est = (2 * tb * D_IN * jnp.dtype(x.dtype).itemsize
           + 2 * tb * D_OUT_PAD * jnp.dtype(out_dtype).itemsize
           + 2 * sum(int(a.size) * a.dtype.itemsize
                     for a in (w0, b0, w1, b1, w2, b2, wh, bh))
           + 4 * tb * (D_H1 + D_H2 + D_H3 + D_OUT_PAD)
           + (4 << 20))
    vmem_limit = int(min(48 << 20, max(32 << 20, est)))

    out = pl.pallas_call(
        ludo_mlp_kernel,
        out_shape=out_shape,
        grid_spec=pltpu.PrefetchScalarGridSpec(
            num_scalar_prefetch=0,
            grid=grid,
            in_specs=in_specs,
            out_specs=out_specs,
        ),
        compiler_params=pltpu.CompilerParams(
            dimension_semantics=("parallel",),
            vmem_limit_bytes=vmem_limit,
        ),
    )(x, w0, b0, w1, b1, w2, b2, wh, bh)

    v = out[:, :D_V]
    pi = out[:, D_V:D_V + D_PI]
    return v, pi


# ---------------------------------------------------------------------------
# Deterministic parameter init (mirrors torch.randn(...) / sqrt(fan_in))
# ---------------------------------------------------------------------------
def init_params(key):
    shapes = [
        (D_IN, D_H1), (D_H1, D_H2), (D_H2, D_H3), (D_H3, D_V), (D_H3, D_PI),
    ]
    params = []
    for shp in shapes:
        key, kw, kb = jax.random.split(key, 3)
        w = jax.random.normal(kw, shp, dtype=jnp.float32) / math.sqrt(shp[0])
        b = jax.random.normal(kb, (1, shp[1]), dtype=jnp.float32)
        params.append((w, b))
    return params


def reference_forward(x, params):
    """Plain-JAX reference matching the PyTorch forward (f32)."""
    (w0, b0), (w1, b1), (w2, b2), (w3, b3), (w4, b4) = params
    x1 = jax.nn.relu(x @ w0 + b0)
    x2 = jax.nn.relu(x1 @ w1 + b1)
    x3 = jax.nn.relu(x2 @ w2 + b2)
    v = jax.nn.relu(x3 @ w3 + b3)
    pi = x3 @ w4 + b4
    return v, pi


if __name__ == "__main__":
    key = jax.random.PRNGKey(0)
    kx, kp, kx2 = jax.random.split(key, 3)

    params = init_params(kp)
    prep_f32 = prepare_params(params, use_bf16=False)   # tight-accuracy path
    prep_bf16 = prepare_params(params, use_bf16=True)   # default fast path

    # ---- small primary test: batch 8, single tile --------------------------
    B = 8
    x = jax.random.normal(kx, (B, D_IN), dtype=jnp.float32)
    v_ref, pi_ref = reference_forward(x, params)

    # f32-operand path: tight check.
    v32, pi32 = ludo_simple_forward(x, prep_f32)
    jax.block_until_ready((v32, pi32))
    assert v32.shape == (B, D_V) and pi32.shape == (B, D_PI)
    assert jnp.allclose(v32, v_ref, atol=1e-4, rtol=1e-4)
    assert jnp.allclose(pi32, pi_ref, atol=1e-4, rtol=1e-4)

    # bf16-MXU-operand path (default): loose check (precision already relaxed
    # from the f64 PyTorch reference).
    v, pi = ludo_simple_forward(x, prep_bf16)
    jax.block_until_ready((v, pi))
    assert jnp.allclose(v, v_ref, atol=5e-2, rtol=5e-2)
    assert jnp.allclose(pi, pi_ref, atol=5e-2, rtol=5e-2)

    # ---- ragged / multi-tile path: B=37 (not a multiple of 8), tb=16 --------
    # grid = cdiv(37, 16) = 3 with a masked partial last block; no jnp.pad copy.
    B2 = 37
    x2 = jax.random.normal(kx2, (B2, D_IN), dtype=jnp.float32)
    v2, pi2 = ludo_simple_forward(x2, prep_f32, tb=16)
    jax.block_until_ready((v2, pi2))
    v2_ref, pi2_ref = reference_forward(x2, params)
    assert v2.shape == (B2, D_V) and pi2.shape == (B2, D_PI)
    assert jnp.allclose(v2, v2_ref, atol=1e-4, rtol=1e-4)
    assert jnp.allclose(pi2, pi2_ref, atol=1e-4, rtol=1e-4)

    # ---- empty-batch edge case ---------------------------------------------
    v0, pi0 = ludo_simple_forward(jnp.zeros((0, D_IN), jnp.float32), prep_f32)
    assert v0.shape == (0, D_V) and pi0.shape == (0, D_PI)

    print("KERNEL_OK")
</pallas_src>

<mosaic_0001>
module attributes {stable_mosaic.version = 11 : i64} {
  func.func @ludo_mlp_kernel(%arg0: i32, %arg1: memref<8x1152xf32, #tpu.memory_space<vmem>>, %arg2: memref<1152x288xf32, #tpu.memory_space<vmem>>, %arg3: memref<1x288xf32, #tpu.memory_space<vmem>>, %arg4: memref<288x72xf32, #tpu.memory_space<vmem>>, %arg5: memref<1x72xf32, #tpu.memory_space<vmem>>, %arg6: memref<72x18xf32, #tpu.memory_space<vmem>>, %arg7: memref<1x18xf32, #tpu.memory_space<vmem>>, %arg8: memref<18x128xf32, #tpu.memory_space<vmem>>, %arg9: memref<1x128xf32, #tpu.memory_space<vmem>>, %arg10: memref<8x128xf32, #tpu.memory_space<vmem>>) attributes {dimension_semantics = [#tpu.dimension_semantics<parallel>], iteration_bounds = array<i64: 1>, scalar_prefetch = 0 : i64, scratch_operands = 0 : i64, tpu.core_type = #tpu.core_type<tc>, window_params = [{transform_indices = @transform_0, window_bounds = array<i64: 8, 1152>}, {pipeline_mode = #tpu.pipeline_mode<synchronous>, transform_indices = @transform_1, window_bounds = array<i64: 1152, 288>}, {pipeline_mode = #tpu.pipeline_mode<synchronous>, transform_indices = @transform_2, window_bounds = array<i64: 1, 288>}, {pipeline_mode = #tpu.pipeline_mode<synchronous>, transform_indices = @transform_3, window_bounds = array<i64: 288, 72>}, {pipeline_mode = #tpu.pipeline_mode<synchronous>, transform_indices = @transform_4, window_bounds = array<i64: 1, 72>}, {pipeline_mode = #tpu.pipeline_mode<synchronous>, transform_indices = @transform_5, window_bounds = array<i64: 72, 18>}, {pipeline_mode = #tpu.pipeline_mode<synchronous>, transform_indices = @transform_6, window_bounds = array<i64: 1, 18>}, {pipeline_mode = #tpu.pipeline_mode<synchronous>, transform_indices = @transform_7, window_bounds = array<i64: 18, 128>}, {pipeline_mode = #tpu.pipeline_mode<synchronous>, transform_indices = @transform_8, window_bounds = array<i64: 1, 128>}, {transform_indices = @transform_9, window_bounds = array<i64: 8, 128>}]} {
    %c0 = arith.constant 0 : index
    %c0_0 = arith.constant 0 : index
    %0 = vector.load %arg1[%c0, %c0_0] : memref<8x1152xf32, #tpu.memory_space<vmem>>, vector<8x1152xf32>
    %c0_1 = arith.constant 0 : index
    %c0_2 = arith.constant 0 : index
    %1 = vector.load %arg2[%c0_1, %c0_2] : memref<1152x288xf32, #tpu.memory_space<vmem>>, vector<1152x288xf32>
    %cst = arith.constant dense<0.000000e+00> : vector<8x288xf32>
    %2 = tpu.matmul %0, %1, %cst {dimension_numbers = #tpu.dot_dimension_numbers<[1], [0], [0], [1], [0, 0, 1, 1], [], []>} : vector<8x1152xf32>, vector<1152x288xf32>, vector<8x288xf32> -> vector<8x288xf32>
    %c0_3 = arith.constant 0 : index
    %c0_4 = arith.constant 0 : index
    %3 = vector.load %arg3[%c0_3, %c0_4] : memref<1x288xf32, #tpu.memory_space<vmem>>, vector<1x288xf32>
    %4 = vector.broadcast %3 : vector<1x288xf32> to vector<8x288xf32>
    %5 = arith.addf %2, %4 : vector<8x288xf32>
    %cst_5 = arith.constant 0.000000e+00 : f32
    %6 = vector.broadcast %cst_5 : f32 to vector<8x288xf32>
    %7 = arith.maximumf %5, %6 : vector<8x288xf32>
    %c0_6 = arith.constant 0 : index
    %c0_7 = arith.constant 0 : index
    %8 = vector.load %arg4[%c0_6, %c0_7] : memref<288x72xf32, #tpu.memory_space<vmem>>, vector<288x72xf32>
    %cst_8 = arith.constant dense<0.000000e+00> : vector<8x72xf32>
    %9 = tpu.matmul %7, %8, %cst_8 {dimension_numbers = #tpu.dot_dimension_numbers<[1], [0], [0], [1], [0, 0, 1, 1], [], []>} : vector<8x288xf32>, vector<288x72xf32>, vector<8x72xf32> -> vector<8x72xf32>
    %c0_9 = arith.constant 0 : index
    %c0_10 = arith.constant 0 : index
    %10 = vector.load %arg5[%c0_9, %c0_10] : memref<1x72xf32, #tpu.memory_space<vmem>>, vector<1x72xf32>
    %11 = vector.broadcast %10 : vector<1x72xf32> to vector<8x72xf32>
    %12 = arith.addf %9, %11 : vector<8x72xf32>
    %cst_11 = arith.constant 0.000000e+00 : f32
    %13 = vector.broadcast %cst_11 : f32 to vector<8x72xf32>
    %14 = arith.maximumf %12, %13 : vector<8x72xf32>
    %c0_12 = arith.constant 0 : index
    %c0_13 = arith.constant 0 : index
    %15 = vector.load %arg6[%c0_12, %c0_13] : memref<72x18xf32, #tpu.memory_space<vmem>>, vector<72x18xf32>
    %cst_14 = arith.constant dense<0.000000e+00> : vector<8x18xf32>
    %16 = tpu.matmul %14, %15, %cst_14 {dimension_numbers = #tpu.dot_dimension_numbers<[1], [0], [0], [1], [0, 0, 1, 1], [], []>} : vector<8x72xf32>, vector<72x18xf32>, vector<8x18xf32> -> vector<8x18xf32>
    %c0_15 = arith.constant 0 : index
    %c0_16 = arith.constant 0 : index
    %17 = vector.load %arg7[%c0_15, %c0_16] : memref<1x18xf32, #tpu.memory_space<vmem>>, vector<1x18xf32>
    %18 = vector.broadcast %17 : vector<1x18xf32> to vector<8x18xf32>
    %19 = arith.addf %16, %18 : vector<8x18xf32>
    %cst_17 = arith.constant 0.000000e+00 : f32
    %20 = vector.broadcast %cst_17 : f32 to vector<8x18xf32>
    %21 = arith.maximumf %19, %20 : vector<8x18xf32>
    %c0_18 = arith.constant 0 : index
    %c0_19 = arith.constant 0 : index
    %22 = vector.load %arg8[%c0_18, %c0_19] : memref<18x128xf32, #tpu.memory_space<vmem>>, vector<18x128xf32>
    %cst_20 = arith.constant dense<0.000000e+00> : vector<8x128xf32>
    %23 = tpu.matmul %21, %22, %cst_20 {dimension_numbers = #tpu.dot_dimension_numbers<[1], [0], [0], [1], [0, 0, 1, 1], [], []>} : vector<8x18xf32>, vector<18x128xf32>, vector<8x128xf32> -> vector<8x128xf32>
    %c0_21 = arith.constant 0 : index
    %c0_22 = arith.constant 0 : index
    %24 = vector.load %arg9[%c0_21, %c0_22] : memref<1x128xf32, #tpu.memory_space<vmem>>, vector<1x128xf32>
    %25 = vector.broadcast %24 : vector<1x128xf32> to vector<8x128xf32>
    %26 = arith.addf %23, %25 : vector<8x128xf32>
    %27 = tpu.iota {dimensions = array<i32: 1>} : vector<8x128xi32>
    %c0_i32 = arith.constant 0 : i32
    %28 = vector.broadcast %c0_i32 : i32 to vector<8x128xi32>
    %29 = arith.cmpi eq, %27, %28 : vector<8x128xi32>
    %cst_23 = arith.constant 0.000000e+00 : f32
    %30 = vector.broadcast %cst_23 : f32 to vector<8x128xf32>
    %31 = arith.maximumf %26, %30 : vector<8x128xf32>
    %32 = arith.select %29, %31, %26 : vector<8x128xi1>, vector<8x128xf32>
    %c0_24 = arith.constant 0 : index
    %c0_25 = arith.constant 0 : index
    %33 = vector.load %arg10[%c0_24, %c0_25] : memref<8x128xf32, #tpu.memory_space<vmem>>, vector<8x128xf32>
    tpu.vector_store %arg10[%c0_24, %c0_25], %32 {strides = array<i32>} : memref<8x128xf32, #tpu.memory_space<vmem>>, vector<8x128xf32>,
    return
  }
  func.func @transform_0(%arg0: i32) -> (i32, i32) {
    %c0_i32 = arith.constant 0 : i32
    %c0_i32_0 = arith.constant 0 : i32
    return %arg0, %c0_i32 : i32, i32
  }
  func.func @transform_1(%arg0: i32) -> (i32, i32) {
    %c0_i32 = arith.constant 0 : i32
    %c0_i32_0 = arith.constant 0 : i32
    %c0_i32_1 = arith.constant 0 : i32
    return %c0_i32, %c0_i32_0 : i32, i32
  }
  func.func @transform_2(%arg0: i32) -> (i32, i32) {
    %c0_i32 = arith.constant 0 : i32
    %c0_i32_0 = arith.constant 0 : i32
    %c0_i32_1 = arith.constant 0 : i32
    return %c0_i32, %c0_i32_0 : i32, i32
  }
  func.func @transform_3(%arg0: i32) -> (i32, i32) {
    %c0_i32 = arith.constant 0 : i32
    %c0_i32_0 = arith.constant 0 : i32
    %c0_i32_1 = arith.constant 0 : i32
    return %c0_i32, %c0_i32_0 : i32, i32
  }
  func.func @transform_4(%arg0: i32) -> (i32, i32) {
    %c0_i32 = arith.constant 0 : i32
    %c0_i32_0 = arith.constant 0 : i32
    %c0_i32_1 = arith.constant 0 : i32
    return %c0_i32, %c0_i32_0 : i32, i32
  }
  func.func @transform_5(%arg0: i32) -> (i32, i32) {
    %c0_i32 = arith.constant 0 : i32
    %c0_i32_0 = arith.constant 0 : i32
    %c0_i32_1 = arith.constant 0 : i32
    return %c0_i32, %c0_i32_0 : i32, i32
  }
  func.func @transform_6(%arg0: i32) -> (i32, i32) {
    %c0_i32 = arith.constant 0 : i32
    %c0_i32_0 = arith.constant 0 : i32
    %c0_i32_1 = arith.constant 0 : i32
    return %c0_i32, %c0_i32_0 : i32, i32
  }
  func.func @transform_7(%arg0: i32) -> (i32, i32) {
    %c0_i32 = arith.constant 0 : i32
    %c0_i32_0 = arith.constant 0 : i32
    %c0_i32_1 = arith.constant 0 : i32
    return %c0_i32, %c0_i32_0 : i32, i32
  }
  func.func @transform_8(%arg0: i32) -> (i32, i32) {
    %c0_i32 = arith.constant 0 : i32
    %c0_i32_0 = arith.constant 0 : i32
    %c0_i32_1 = arith.constant 0 : i32
    return %c0_i32, %c0_i32_0 : i32, i32
  }
  func.func @transform_9(%arg0: i32) -> (i32, i32) {
    %c0_i32 = arith.constant 0 : i32
    %c0_i32_0 = arith.constant 0 : i32
    return %arg0, %c0_i32 : i32, i32
  }
}

</mosaic_0001>

<llo_original>
// kernel: tpu_custom_call.1
$region0: #{tpu_custom_call.1}
  #allocation0 [shape = 'u32[]', space=smem, size = 0x4, offset = 0x4, fixed_abs, tag = 'smem constant byte address 0x4 - core index']
  #allocation1 [shape = 'u32[72,128]{1,0:T(1,128)}', space=vmem, size = 0x9000, scoped, tag = 'internal scratch']
  %s0 = inlined_call_operand.vmem [shape: f32[8,1152], index: 0, kind: input, shape index: {}]
  %s1 = inlined_call_operand.vmem [shape: f32[1152,288], index: 1, kind: input, shape index: {}]
  %s2 = inlined_call_operand.vmem [shape: f32[1,288], index: 2, kind: input, shape index: {}]
  %s3 = inlined_call_operand.vmem [shape: f32[288,72], index: 3, kind: input, shape index: {}]
  %s4 = inlined_call_operand.vmem [shape: f32[1,72], index: 4, kind: input, shape index: {}]
  %s5 = inlined_call_operand.vmem [shape: f32[72,18], index: 5, kind: input, shape index: {}]
  %s6 = inlined_call_operand.vmem [shape: f32[1,18], index: 6, kind: input, shape index: {}]
  %s7 = inlined_call_operand.vmem [shape: f32[18,128], index: 7, kind: input, shape index: {}]
  %s8 = inlined_call_operand.vmem [shape: f32[1,128], index: 8, kind: input, shape index: {}]
  %s9 = inlined_call_operand.hbm [shape: f32[8,128], index: 9, kind: output, shape index: {}]
  %s10 = sld [smem:[#allocation0]]
  $region46: #{tpu_custom_call.1} parent=0
    _
  %s12 = ssub.s32 1, %s10
  %s13 = scalar_select 0, %s12, %s10
  $region1: #{tpu_custom_call.1} parent=0
    #allocation2 [shape = 'u8[4096]{0}', space=vmem, size = 0x1000, scoped, tag = 'output window, operand 0, single buffered']
    #allocation3 [shape = 's32[1]{0}', space=sflag, size = 0x4, scoped, tag = 'scoped memory for tpu_custom_call.1']
    %14 = vsyncpa [#allocation3], 0
    // Predicated region
    $region2: #{tpu_custom_call.1} parent=1 // pred_check
      _
    $region3: #{tpu_custom_call.1} parent=1 // pred_check_branch
      %16 = sbr.rel (0) target = $region5
    $region4: #{tpu_custom_call.1} parent=1 // pred_region
      _
    $region5: #{tpu_custom_call.1} parent=1 // pred_fallthru
      _
    // Predicated region
    $region6: #{tpu_custom_call.1} parent=1 // pred_check
      _
    $region7: #{tpu_custom_call.1} parent=1 // pred_check_branch
      %18 = sbr.rel (0) target = $region9
    $region8: #{tpu_custom_call.1} parent=1 // pred_region
      _
    $region9: #{tpu_custom_call.1} parent=1 // pred_fallthru
      _
    // Predicated region
    $region10: #{tpu_custom_call.1} parent=1 // pred_check
      _
    $region11: #{tpu_custom_call.1} parent=1 // pred_check_branch
      %20 = sbr.rel (0) target = $region13
    $region12: #{tpu_custom_call.1} parent=1 // pred_region
      _
    $region13: #{tpu_custom_call.1} parent=1 // pred_fallthru
      _
    // Predicated region
    $region14: #{tpu_custom_call.1} parent=1 // pred_check
      _
    $region15: #{tpu_custom_call.1} parent=1 // pred_check_branch
      %22 = sbr.rel (0) target = $region17
    $region16: #{tpu_custom_call.1} parent=1 // pred_region
      _
    $region17: #{tpu_custom_call.1} parent=1 // pred_fallthru
      _
    // Predicated region
    $region18: #{tpu_custom_call.1} parent=1 // pred_check
      _
    $region19: #{tpu_custom_call.1} parent=1 // pred_check_branch
      %24 = sbr.rel (0) target = $region21
    $region20: #{tpu_custom_call.1} parent=1 // pred_region
      _
    $region21: #{tpu_custom_call.1} parent=1 // pred_fallthru
      _
    // Predicated region
    $region22: #{tpu_custom_call.1} parent=1 // pred_check
      _
    $region23: #{tpu_custom_call.1} parent=1 // pred_check_branch
      %26 = sbr.rel (0) target = $region25
    $region24: #{tpu_custom_call.1} parent=1 // pred_region
      _
    $region25: #{tpu_custom_call.1} parent=1 // pred_fallthru
      _
    // Predicated region
    $region26: #{tpu_custom_call.1} parent=1 // pred_check
      _
    $region27: #{tpu_custom_call.1} parent=1 // pred_check_branch
      %28 = sbr.rel (0) target = $region29
    $region28: #{tpu_custom_call.1} parent=1 // pred_region
      _
    $region29: #{tpu_custom_call.1} parent=1 // pred_fallthru
      _
    // Predicated region
    $region30: #{tpu_custom_call.1} parent=1 // pred_check
      _
    $region31: #{tpu_custom_call.1} parent=1 // pred_check_branch
      %30 = sbr.rel (0) target = $region33
    $region32: #{tpu_custom_call.1} parent=1 // pred_region
      _
    $region33: #{tpu_custom_call.1} parent=1 // pred_fallthru
      _
    // Predicated region
    $region34: #{tpu_custom_call.1} parent=1 // pred_check
      _
    $region35: #{tpu_custom_call.1} parent=1 // pred_check_branch
      %32 = sbr.rel (0) target = $region37
    $region36: #{tpu_custom_call.1} parent=1 // pred_region
      _
    $region37: #{tpu_custom_call.1} parent=1 // pred_fallthru
      _
    %v33 = vld [vmem:[%s0] sm:$0xff]
    %v34 = vld [vmem:[%s0 + $0x8] sm:$0xff]
    %v35 = vld [vmem:[%s0 + $0x10] sm:$0xff]
    %v36 = vld [vmem:[%s0 + $0x18] sm:$0xff]
    %v37 = vld [vmem:[%s0 + $0x20] sm:$0xff]
    %v38 = vld [vmem:[%s0 + $0x28] sm:$0xff]
    %v39 = vld [vmem:[%s0 + $0x30] sm:$0xff]
    %v40 = vld [vmem:[%s0 + $0x38] sm:$0xff]
    %v41 = vld [vmem:[%s0 + $0x40] sm:$0xff]
    %v42 = vld [vmem:[%s1] sm:$0xff]
    %v43 = vld [vmem:[%s1 + $0x8] sm:$0xff]
    %v44 = vld [vmem:[%s1 + $0x10] sm:$0xff]
    %v45 = vld [vmem:[%s1 + $0x18] sm:$0xff]
    %v46 = vld [vmem:[%s1 + $0x20] sm:$0xff]
    %v47 = vld [vmem:[%s1 + $0x28] sm:$0xff]
    %v48 = vld [vmem:[%s1 + $0x30] sm:$0xff]
    %v49 = vld [vmem:[%s1 + $0x38] sm:$0xff]
    %v50 = vld [vmem:[%s1 + $0x40] sm:$0xff]
    %v51 = vld [vmem:[%s1 + $0x48] sm:$0xff]
    %v52 = vld [vmem:[%s1 + $0x50] sm:$0xff]
    %v53 = vld [vmem:[%s1 + $0x58] sm:$0xff]
    %v54 = vld [vmem:[%s1 + $0x60] sm:$0xff]
    %v55 = vld [vmem:[%s1 + $0x68] sm:$0xff]
    %v56 = vld [vmem:[%s1 + $0x70] sm:$0xff]
    %v57 = vld [vmem:[%s1 + $0x78] sm:$0xff]
    %v58 = vld [vmem:[%s1 + $0x80] sm:$0xff]
    %v59 = vld [vmem:[%s1 + $0x88] sm:$0xff]
    %v60 = vld [vmem:[%s1 + $0x90] sm:$0xff]
    %v61 = vld [vmem:[%s1 + $0x98] sm:$0xff]
    %v62 = vld [vmem:[%s1 + $0xa0] sm:$0xff]
    %v63 = vld [vmem:[%s1 + $0xa8] sm:$0xff]
    %v64 = vld [vmem:[%s1 + $0xb0] sm:$0xff]
    %v65 = vld [vmem:[%s1 + $0xb8] sm:$0xff]
    %v66 = vld [vmem:[%s1 + $0xc0] sm:$0xff]
    %v67 = vld [vmem:[%s1 + $0xc8] sm:$0xff]
    %v68 = vld [vmem:[%s1 + $0xd0] sm:$0xff]
    %v69 = vld [vmem:[%s1 + $0xd8] sm:$0xff]
    %v70 = vld [vmem:[%s1 + $0xe0] sm:$0xff]
    %v71 = vld [vmem:[%s1 + $0xe8] sm:$0xff]
    %v72 = vld [vmem:[%s1 + $0xf0] sm:$0xff]
    %v73 = vld [vmem:[%s1 + $0xf8] sm:$0xff]
    %v74 = vld [vmem:[%s1 + $0x100] sm:$0xff]
    %v75 = vld [vmem:[%s1 + $0x108] sm:$0xff]
    %v76 = vld [vmem:[%s1 + $0x110] sm:$0xff]
    %v77 = vld [vmem:[%s1 + $0x118] sm:$0xff]
    %v78 = vld [vmem:[%s1 + $0x120] sm:$0xff]
    %v79 = vld [vmem:[%s1 + $0x128] sm:$0xff]
    %v80 = vld [vmem:[%s1 + $0x130] sm:$0xff]
    %v81 = vld [vmem:[%s1 + $0x138] sm:$0xff]
    %v82 = vld [vmem:[%s1 + $0x140] sm:$0xff]
    %v83 = vld [vmem:[%s1 + $0x148] sm:$0xff]
    %v84 = vld [vmem:[%s1 + $0x150] sm:$0xff]
    %v85 = vld [vmem:[%s1 + $0x158] sm:$0xff]
    %v86 = vld [vmem:[%s1 + $0x160] sm:$0xff]
    %v87 = vld [vmem:[%s1 + $0x168] sm:$0xff]
    %v88 = vld [vmem:[%s1 + $0x170] sm:$0xff]
    %v89 = vld [vmem:[%s1 + $0x178] sm:$0xff]
    %v90 = vld [vmem:[%s1 + $0x180] sm:$0xff]
    %v91 = vld [vmem:[%s1 + $0x188] sm:$0xff]
    %v92 = vld [vmem:[%s1 + $0x190] sm:$0xff]
    %v93 = vld [vmem:[%s1 + $0x198] sm:$0xff]
    %v94 = vld [vmem:[%s1 + $0x1a0] sm:$0xff]
    %v95 = vld [vmem:[%s1 + $0x1a8] sm:$0xff]
    %v96 = vld [vmem:[%s1 + $0x1b0] sm:$0xff]
    %v97 = vld [vmem:[%s1 + $0x1b8] sm:$0xff]
    %v98 = vld [vmem:[%s1 + $0x1c0] sm:$0xff]
    %v99 = vld [vmem:[%s1 + $0x1c8] sm:$0xff]
    %v100 = vld [vmem:[%s1 + $0x1d0] sm:$0xff]
    %v101 = vld [vmem:[%s1 + $0x1d8] sm:$0xff]
    %v102 = vld [vmem:[%s1 + $0x1e0] sm:$0xff]
    %v103 = vld [vmem:[%s1 + $0x1e8] sm:$0xff]
    %v104 = vld [vmem:[%s1 + $0x1f0] sm:$0xff]
    %v105 = vld [vmem:[%s1 + $0x1f8] sm:$0xff]
    %v106 = vld [vmem:[%s1 + $0x200] sm:$0xff]
    %v107 = vld [vmem:[%s1 + $0x208] sm:$0xff]
    %v108 = vld [vmem:[%s1 + $0x210] sm:$0xff]
    %v109 = vld [vmem:[%s1 + $0x218] sm:$0xff]
    %v110 = vld [vmem:[%s1 + $0x220] sm:$0xff]
    %v111 = vld [vmem:[%s1 + $0x228] sm:$0xff]
    %v112 = vld [vmem:[%s1 + $0x230] sm:$0xff]
    %v113 = vld [vmem:[%s1 + $0x238] sm:$0xff]
    %v114 = vld [vmem:[%s1 + $0x240] sm:$0xff]
    %v115 = vld [vmem:[%s1 + $0x248] sm:$0xff]
    %v116 = vld [vmem:[%s1 + $0x250] sm:$0xff]
    %v117 = vld [vmem:[%s1 + $0x258] sm:$0xff]
    %v118 = vld [vmem:[%s1 + $0x260] sm:$0xff]
    %v119 = vld [vmem:[%s1 + $0x268] sm:$0xff]
    %v120 = vld [vmem:[%s1 + $0x270] sm:$0xff]
    %v121 = vld [vmem:[%s1 + $0x278] sm:$0xff]
    %v122 = vld [vmem:[%s1 + $0x280] sm:$0xff]
    %v123 = vld [vmem:[%s1 + $0x288] sm:$0xff]
    %v124 = vld [vmem:[%s1 + $0x290] sm:$0xff]
    %v125 = vld [vmem:[%s1 + $0x298] sm:$0xff]
    %v126 = vld [vmem:[%s1 + $0x2a0] sm:$0xff]
    %v127 = vld [vmem:[%s1 + $0x2a8] sm:$0xff]
    %v128 = vld [vmem:[%s1 + $0x2b0] sm:$0xff]
    %v129 = vld [vmem:[%s1 + $0x2b8] sm:$0xff]
    %v130 = vld [vmem:[%s1 + $0x2c0] sm:$0xff]
    %v131 = vld [vmem:[%s1 + $0x2c8] sm:$0xff]
    %v132 = vld [vmem:[%s1 + $0x2d0] sm:$0xff]
    %v133 = vld [vmem:[%s1 + $0x2d8] sm:$0xff]
    %v134 = vld [vmem:[%s1 + $0x2e0] sm:$0xff]
    %v135 = vld [vmem:[%s1 + $0x2e8] sm:$0xff]
    %v136 = vld [vmem:[%s1 + $0x2f0] sm:$0xff]
    %v137 = vld [vmem:[%s1 + $0x2f8] sm:$0xff]
    %v138 = vld [vmem:[%s1 + $0x300] sm:$0xff]
    %v139 = vld [vmem:[%s1 + $0x308] sm:$0xff]
    %v140 = vld [vmem:[%s1 + $0x310] sm:$0xff]
    %v141 = vld [vmem:[%s1 + $0x318] sm:$0xff]
    %v142 = vld [vmem:[%s1 + $0x320] sm:$0xff]
    %v143 = vld [vmem:[%s1 + $0x328] sm:$0xff]
    %v144 = vld [vmem:[%s1 + $0x330] sm:$0xff]
    %v145 = vld [vmem:[%s1 + $0x338] sm:$0xff]
    %v146 = vld [vmem:[%s1 + $0x340] sm:$0xff]
    %v147 = vld [vmem:[%s1 + $0x348] sm:$0xff]
    %v148 = vld [vmem:[%s1 + $0x350] sm:$0xff]
    %v149 = vld [vmem:[%s1 + $0x358] sm:$0xff]
    %v150 = vld [vmem:[%s1 + $0x360] sm:$0xff]
    %v151 = vld [vmem:[%s1 + $0x368] sm:$0xff]
    %v152 = vld [vmem:[%s1 + $0x370] sm:$0xff]
    %v153 = vld [vmem:[%s1 + $0x378] sm:$0xff]
    %v154 = vld [vmem:[%s1 + $0x380] sm:$0xff]
    %v155 = vld [vmem:[%s1 + $0x388] sm:$0xff]
    %v156 = vld [vmem:[%s1 + $0x390] sm:$0xff]
    %v157 = vld [vmem:[%s1 + $0x398] sm:$0xff]
    %v158 = vld [vmem:[%s1 + $0x3a0] sm:$0xff]
    %v159 = vld [vmem:[%s1 + $0x3a8] sm:$0xff]
    %v160 = vld [vmem:[%s1 + $0x3b0] sm:$0xff]
    %v161 = vld [vmem:[%s1 + $0x3b8] sm:$0xff]
    %v162 = vld [vmem:[%s1 + $0x3c0] sm:$0xff]
    %v163 = vld [vmem:[%s1 + $0x3c8] sm:$0xff]
    %v164 = vld [vmem:[%s1 + $0x3d0] sm:$0xff]
    %v165 = vld [vmem:[%s1 + $0x3d8] sm:$0xff]
    %v166 = vld [vmem:[%s1 + $0x3e0] sm:$0xff]
    %v167 = vld [vmem:[%s1 + $0x3e8] sm:$0xff]
    %v168 = vld [vmem:[%s1 + $0x3f0] sm:$0xff]
    %v169 = vld [vmem:[%s1 + $0x3f8] sm:$0xff]
    %v170 = vld [vmem:[%s1 + $0x400] sm:$0xff]
    %v171 = vld [vmem:[%s1 + $0x408] sm:$0xff]
    %v172 = vld [vmem:[%s1 + $0x410] sm:$0xff]
    %v173 = vld [vmem:[%s1 + $0x418] sm:$0xff]
    %v174 = vld [vmem:[%s1 + $0x420] sm:$0xff]
    %v175 = vld [vmem:[%s1 + $0x428] sm:$0xff]
    %v176 = vld [vmem:[%s1 + $0x430] sm:$0xff]
    %v177 = vld [vmem:[%s1 + $0x438] sm:$0xff]
    %v178 = vld [vmem:[%s1 + $0x440] sm:$0xff]
    %v179 = vld [vmem:[%s1 + $0x448] sm:$0xff]
    %v180 = vld [vmem:[%s1 + $0x450] sm:$0xff]
    %v181 = vld [vmem:[%s1 + $0x458] sm:$0xff]
    %v182 = vld [vmem:[%s1 + $0x460] sm:$0xff]
    %v183 = vld [vmem:[%s1 + $0x468] sm:$0xff]
    %v184 = vld [vmem:[%s1 + $0x470] sm:$0xff]
    %v185 = vld [vmem:[%s1 + $0x478] sm:$0xff]
    %v186 = vld [vmem:[%s1 + $0x480] sm:$0xff]
    %v187 = vld [vmem:[%s1 + $0x488] sm:$0xff]
    %v188 = vld [vmem:[%s1 + $0x490] sm:$0xff]
    %v189 = vld [vmem:[%s1 + $0x498] sm:$0xff]
    %v190 = vld [vmem:[%s1 + $0x4a0] sm:$0xff]
    %v191 = vld [vmem:[%s1 + $0x4a8] sm:$0xff]
    %v192 = vld [vmem:[%s1 + $0x4b0] sm:$0xff]
    %v193 = vld [vmem:[%s1 + $0x4b8] sm:$0xff]
    %v194 = vld [vmem:[%s1 + $0x4c0] sm:$0xff]
    %v195 = vld [vmem:[%s1 + $0x4c8] sm:$0xff]
    %v196 = vld [vmem:[%s1 + $0x4d0] sm:$0xff]
    %v197 = vld [vmem:[%s1 + $0x4d8] sm:$0xff]
    %v198 = vld [vmem:[%s1 + $0x4e0] sm:$0xff]
    %v199 = vld [vmem:[%s1 + $0x4e8] sm:$0xff]
    %v200 = vld [vmem:[%s1 + $0x4f0] sm:$0xff]
    %v201 = vld [vmem:[%s1 + $0x4f8] sm:$0xff]
    %v202 = vld [vmem:[%s1 + $0x500] sm:$0xff]
    %v203 = vld [vmem:[%s1 + $0x508] sm:$0xff]
    %v204 = vld [vmem:[%s1 + $0x510] sm:$0xff]
    %v205 = vld [vmem:[%s1 + $0x518] sm:$0xff]
    %v206 = vld [vmem:[%s1 + $0x520] sm:$0xff]
    %v207 = vld [vmem:[%s1 + $0x528] sm:$0xff]
    %v208 = vld [vmem:[%s1 + $0x530] sm:$0xff]
    %v209 = vld [vmem:[%s1 + $0x538] sm:$0xff]
    %v210 = vld [vmem:[%s1 + $0x540] sm:$0xff]
    %v211 = vld [vmem:[%s1 + $0x548] sm:$0xff]
    %v212 = vld [vmem:[%s1 + $0x550] sm:$0xff]
    %v213 = vld [vmem:[%s1 + $0x558] sm:$0xff]
    %v214 = vld [vmem:[%s1 + $0x560] sm:$0xff]
    %v215 = vld [vmem:[%s1 + $0x568] sm:$0xff]
    %v216 = vld [vmem:[%s1 + $0x570] sm:$0xff]
    %v217 = vld [vmem:[%s1 + $0x578] sm:$0xff]
    %v218 = vld [vmem:[%s1 + $0x580] sm:$0xff]
    %v219 = vld [vmem:[%s1 + $0x588] sm:$0xff]
    %v220 = vld [vmem:[%s1 + $0x590] sm:$0xff]
    %v221 = vld [vmem:[%s1 + $0x598] sm:$0xff]
    %v222 = vld [vmem:[%s1 + $0x5a0] sm:$0xff]
    %v223 = vld [vmem:[%s1 + $0x5a8] sm:$0xff]
    %v224 = vld [vmem:[%s1 + $0x5b0] sm:$0xff]
    %v225 = vld [vmem:[%s1 + $0x5b8] sm:$0xff]
    %v226 = vld [vmem:[%s1 + $0x5c0] sm:$0xff]
    %v227 = vld [vmem:[%s1 + $0x5c8] sm:$0xff]
    %v228 = vld [vmem:[%s1 + $0x5d0] sm:$0xff]
    %v229 = vld [vmem:[%s1 + $0x5d8] sm:$0xff]
    %v230 = vld [vmem:[%s1 + $0x5e0] sm:$0xff]
    %v231 = vld [vmem:[%s1 + $0x5e8] sm:$0xff]
    %v232 = vld [vmem:[%s1 + $0x5f0] sm:$0xff]
    %v233 = vld [vmem:[%s1 + $0x5f8] sm:$0xff]
    %v234 = vld [vmem:[%s1 + $0x600] sm:$0xff]
    %v235 = vld [vmem:[%s1 + $0x608] sm:$0xff]
    %v236 = vld [vmem:[%s1 + $0x610] sm:$0xff]
    %v237 = vld [vmem:[%s1 + $0x618] sm:$0xff]
    %v238 = vld [vmem:[%s1 + $0x620] sm:$0xff]
    %v239 = vld [vmem:[%s1 + $0x628] sm:$0xff]
    %v240 = vld [vmem:[%s1 + $0x630] sm:$0xff]
    %v241 = vld [vmem:[%s1 + $0x638] sm:$0xff]
    %v242 = vld [vmem:[%s1 + $0x640] sm:$0xff]
    %v243 = vld [vmem:[%s1 + $0x648] sm:$0xff]
    %v244 = vld [vmem:[%s1 + $0x650] sm:$0xff]
    %v245 = vld [vmem:[%s1 + $0x658] sm:$0xff]
    %v246 = vld [vmem:[%s1 + $0x660] sm:$0xff]
    %v247 = vld [vmem:[%s1 + $0x668] sm:$0xff]
    %v248 = vld [vmem:[%s1 + $0x670] sm:$0xff]
    %v249 = vld [vmem:[%s1 + $0x678] sm:$0xff]
    %v250 = vld [vmem:[%s1 + $0x680] sm:$0xff]
    %v251 = vld [vmem:[%s1 + $0x688] sm:$0xff]
    %v252 = vld [vmem:[%s1 + $0x690] sm:$0xff]
    %v253 = vld [vmem:[%s1 + $0x698] sm:$0xff]
    %v254 = vld [vmem:[%s1 + $0x6a0] sm:$0xff]
    %v255 = vld [vmem:[%s1 + $0x6a8] sm:$0xff]
    %v256 = vld [vmem:[%s1 + $0x6b0] sm:$0xff]
    %v257 = vld [vmem:[%s1 + $0x6b8] sm:$0xff]
    %v258 = vld [vmem:[%s1 + $0x6c0] sm:$0xff]
    %v259 = vld [vmem:[%s1 + $0x6c8] sm:$0xff]
    %v260 = vld [vmem:[%s1 + $0x6d0] sm:$0xff]
    %v261 = vld [vmem:[%s1 + $0x6d8] sm:$0xff]
    %v262 = vld [vmem:[%s1 + $0x6e0] sm:$0xff]
    %v263 = vld [vmem:[%s1 + $0x6e8] sm:$0xff]
    %v264 = vld [vmem:[%s1 + $0x6f0] sm:$0xff]
    %v265 = vld [vmem:[%s1 + $0x6f8] sm:$0xff]
    %v266 = vld [vmem:[%s1 + $0x700] sm:$0xff]
    %v267 = vld [vmem:[%s1 + $0x708] sm:$0xff]
    %v268 = vld [vmem:[%s1 + $0x710] sm:$0xff]
    %v269 = vld [vmem:[%s1 + $0x718] sm:$0xff]
    %v270 = vld [vmem:[%s1 + $0x720] sm:$0xff]
    %v271 = vld [vmem:[%s1 + $0x728] sm:$0xff]
    %v272 = vld [vmem:[%s1 + $0x730] sm:$0xff]
    %v273 = vld [vmem:[%s1 + $0x738] sm:$0xff]
    %v274 = vld [vmem:[%s1 + $0x740] sm:$0xff]
    %v275 = vld [vmem:[%s1 + $0x748] sm:$0xff]
    %v276 = vld [vmem:[%s1 + $0x750] sm:$0xff]
    %v277 = vld [vmem:[%s1 + $0x758] sm:$0xff]
    %v278 = vld [vmem:[%s1 + $0x760] sm:$0xff]
    %v279 = vld [vmem:[%s1 + $0x768] sm:$0xff]
    %v280 = vld [vmem:[%s1 + $0x770] sm:$0xff]
    %v281 = vld [vmem:[%s1 + $0x778] sm:$0xff]
    %v282 = vld [vmem:[%s1 + $0x780] sm:$0xff]
    %v283 = vld [vmem:[%s1 + $0x788] sm:$0xff]
    %v284 = vld [vmem:[%s1 + $0x790] sm:$0xff]
    %v285 = vld [vmem:[%s1 + $0x798] sm:$0xff]
    %v286 = vld [vmem:[%s1 + $0x7a0] sm:$0xff]
    %v287 = vld [vmem:[%s1 + $0x7a8] sm:$0xff]
    %v288 = vld [vmem:[%s1 + $0x7b0] sm:$0xff]
    %v289 = vld [vmem:[%s1 + $0x7b8] sm:$0xff]
    %v290 = vld [vmem:[%s1 + $0x7c0] sm:$0xff]
    %v291 = vld [vmem:[%s1 + $0x7c8] sm:$0xff]
    %v292 = vld [vmem:[%s1 + $0x7d0] sm:$0xff]
    %v293 = vld [vmem:[%s1 + $0x7d8] sm:$0xff]
    %v294 = vld [vmem:[%s1 + $0x7e0] sm:$0xff]
    %v295 = vld [vmem:[%s1 + $0x7e8] sm:$0xff]
    %v296 = vld [vmem:[%s1 + $0x7f0] sm:$0xff]
    %v297 = vld [vmem:[%s1 + $0x7f8] sm:$0xff]
    %v298 = vld [vmem:[%s1 + $0x800] sm:$0xff]
    %v299 = vld [vmem:[%s1 + $0x808] sm:$0xff]
    %v300 = vld [vmem:[%s1 + $0x810] sm:$0xff]
    %v301 = vld [vmem:[%s1 + $0x818] sm:$0xff]
    %v302 = vld [vmem:[%s1 + $0x820] sm:$0xff]
    %v303 = vld [vmem:[%s1 + $0x828] sm:$0xff]
    %v304 = vld [vmem:[%s1 + $0x830] sm:$0xff]
    %v305 = vld [vmem:[%s1 + $0x838] sm:$0xff]
    %v306 = vld [vmem:[%s1 + $0x840] sm:$0xff]
    %v307 = vld [vmem:[%s1 + $0x848] sm:$0xff]
    %v308 = vld [vmem:[%s1 + $0x850] sm:$0xff]
    %v309 = vld [vmem:[%s1 + $0x858] sm:$0xff]
    %v310 = vld [vmem:[%s1 + $0x860] sm:$0xff]
    %v311 = vld [vmem:[%s1 + $0x868] sm:$0xff]
    %v312 = vld [vmem:[%s1 + $0x870] sm:$0xff]
    %v313 = vld [vmem:[%s1 + $0x878] sm:$0xff]
    %v314 = vld [vmem:[%s1 + $0x880] sm:$0xff]
    %v315 = vld [vmem:[%s1 + $0x888] sm:$0xff]
    %v316 = vld [vmem:[%s1 + $0x890] sm:$0xff]
    %v317 = vld [vmem:[%s1 + $0x898] sm:$0xff]
    %v318 = vld [vmem:[%s1 + $0x8a0] sm:$0xff]
    %v319 = vld [vmem:[%s1 + $0x8a8] sm:$0xff]
    %v320 = vld [vmem:[%s1 + $0x8b0] sm:$0xff]
    %v321 = vld [vmem:[%s1 + $0x8b8] sm:$0xff]
    %v322 = vld [vmem:[%s1 + $0x8c0] sm:$0xff]
    %v323 = vld [vmem:[%s1 + $0x8c8] sm:$0xff]
    %v324 = vld [vmem:[%s1 + $0x8d0] sm:$0xff]
    %v325 = vld [vmem:[%s1 + $0x8d8] sm:$0xff]
    %v326 = vld [vmem:[%s1 + $0x8e0] sm:$0xff]
    %v327 = vld [vmem:[%s1 + $0x8e8] sm:$0xff]
    %v328 = vld [vmem:[%s1 + $0x8f0] sm:$0xff]
    %v329 = vld [vmem:[%s1 + $0x8f8] sm:$0xff]
    %v330 = vld [vmem:[%s1 + $0x900] sm:$0xff]
    %v331 = vld [vmem:[%s1 + $0x908] sm:$0xff]
    %v332 = vld [vmem:[%s1 + $0x910] sm:$0xff]
    %v333 = vld [vmem:[%s1 + $0x918] sm:$0xff]
    %v334 = vld [vmem:[%s1 + $0x920] sm:$0xff]
    %v335 = vld [vmem:[%s1 + $0x928] sm:$0xff]
    %v336 = vld [vmem:[%s1 + $0x930] sm:$0xff]
    %v337 = vld [vmem:[%s1 + $0x938] sm:$0xff]
    %v338 = vld [vmem:[%s1 + $0x940] sm:$0xff]
    %v339 = vld [vmem:[%s1 + $0x948] sm:$0xff]
    %v340 = vld [vmem:[%s1 + $0x950] sm:$0xff]
    %v341 = vld [vmem:[%s1 + $0x958] sm:$0xff]
    %v342 = vld [vmem:[%s1 + $0x960] sm:$0xff]
    %v343 = vld [vmem:[%s1 + $0x968] sm:$0xff]
    %v344 = vld [vmem:[%s1 + $0x970] sm:$0xff]
    %v345 = vld [vmem:[%s1 + $0x978] sm:$0xff]
    %v346 = vld [vmem:[%s1 + $0x980] sm:$0xff]
    %v347 = vld [vmem:[%s1 + $0x988] sm:$0xff]
    %v348 = vld [vmem:[%s1 + $0x990] sm:$0xff]
    %v349 = vld [vmem:[%s1 + $0x998] sm:$0xff]
    %v350 = vld [vmem:[%s1 + $0x9a0] sm:$0xff]
    %v351 = vld [vmem:[%s1 + $0x9a8] sm:$0xff]
    %v352 = vld [vmem:[%s1 + $0x9b0] sm:$0xff]
    %v353 = vld [vmem:[%s1 + $0x9b8] sm:$0xff]
    %v354 = vld [vmem:[%s1 + $0x9c0] sm:$0xff]
    %v355 = vld [vmem:[%s1 + $0x9c8] sm:$0xff]
    %v356 = vld [vmem:[%s1 + $0x9d0] sm:$0xff]
    %v357 = vld [vmem:[%s1 + $0x9d8] sm:$0xff]
    %v358 = vld [vmem:[%s1 + $0x9e0] sm:$0xff]
    %v359 = vld [vmem:[%s1 + $0x9e8] sm:$0xff]
    %v360 = vld [vmem:[%s1 + $0x9f0] sm:$0xff]
    %v361 = vld [vmem:[%s1 + $0x9f8] sm:$0xff]
    %v362 = vld [vmem:[%s1 + $0xa00] sm:$0xff]
    %v363 = vld [vmem:[%s1 + $0xa08] sm:$0xff]
    %v364 = vld [vmem:[%s1 + $0xa10] sm:$0xff]
    %v365 = vld [vmem:[%s1 + $0xa18] sm:$0xff]
    %v366 = vld [vmem:[%s1 + $0xa20] sm:$0xff]
    %v367 = vld [vmem:[%s1 + $0xa28] sm:$0xff]
    %v368 = vld [vmem:[%s1 + $0xa30] sm:$0xff]
    %v369 = vld [vmem:[%s1 + $0xa38] sm:$0xff]
    %v370 = vld [vmem:[%s1 + $0xa40] sm:$0xff]
    %v371 = vld [vmem:[%s1 + $0xa48] sm:$0xff]
    %v372 = vld [vmem:[%s1 + $0xa50] sm:$0xff]
    %v373 = vld [vmem:[%s1 + $0xa58] sm:$0xff]
    %v374 = vld [vmem:[%s1 + $0xa60] sm:$0xff]
    %v375 = vld [vmem:[%s1 + $0xa68] sm:$0xff]
    %v376 = vld [vmem:[%s1 + $0xa70] sm:$0xff]
    %v377 = vld [vmem:[%s1 + $0xa78] sm:$0xff]
    %v378 = vld [vmem:[%s1 + $0xa80] sm:$0xff]
    %v379 = vld [vmem:[%s1 + $0xa88] sm:$0xff]
    %v380 = vld [vmem:[%s1 + $0xa90] sm:$0xff]
    %v381 = vld [vmem:[%s1 + $0xa98] sm:$0xff]
    %v382 = vld [vmem:[%s1 + $0xaa0] sm:$0xff]
    %v383 = vld [vmem:[%s1 + $0xaa8] sm:$0xff]
    %v384 = vld [vmem:[%s1 + $0xab0] sm:$0xff]
    %v385 = vld [vmem:[%s1 + $0xab8] sm:$0xff]
    %v386 = vld [vmem:[%s1 + $0xac0] sm:$0xff]
    %v387 = vld [vmem:[%s1 + $0xac8] sm:$0xff]
    %v388 = vld [vmem:[%s1 + $0xad0] sm:$0xff]
    %v389 = vld [vmem:[%s1 + $0xad8] sm:$0xff]
    %v390 = vld [vmem:[%s1 + $0xae0] sm:$0xff]
    %v391 = vld [vmem:[%s1 + $0xae8] sm:$0xff]
    %v392 = vld [vmem:[%s1 + $0xaf0] sm:$0xff]
    %v393 = vld [vmem:[%s1 + $0xaf8] sm:$0xff]
    %v394 = vld [vmem:[%s1 + $0xb00] sm:$0xff]
    %v395 = vld [vmem:[%s1 + $0xb08] sm:$0xff]
    %v396 = vld [vmem:[%s1 + $0xb10] sm:$0xff]
    %v397 = vld [vmem:[%s1 + $0xb18] sm:$0xff]
    %v398 = vld [vmem:[%s1 + $0xb20] sm:$0xff]
    %v399 = vld [vmem:[%s1 + $0xb28] sm:$0xff]
    %v400 = vld [vmem:[%s1 + $0xb30] sm:$0xff]
    %v401 = vld [vmem:[%s1 + $0xb38] sm:$0xff]
    %v402 = vld [vmem:[%s1 + $0xb40] sm:$0xff]
    %v403 = vld [vmem:[%s1 + $0xb48] sm:$0xff]
    %v404 = vld [vmem:[%s1 + $0xb50] sm:$0xff]
    %v405 = vld [vmem:[%s1 + $0xb58] sm:$0xff]
    %v406 = vld [vmem:[%s1 + $0xb60] sm:$0xff]
    %v407 = vld [vmem:[%s1 + $0xb68] sm:$0xff]
    %v408 = vld [vmem:[%s1 + $0xb70] sm:$0xff]
    %v409 = vld [vmem:[%s1 + $0xb78] sm:$0xff]
    %v410 = vld [vmem:[%s1 + $0xb80] sm:$0xff]
    %v411 = vld [vmem:[%s1 + $0xb88] sm:$0xff]
    %v412 = vld [vmem:[%s1 + $0xb90] sm:$0xff]
    %v413 = vld [vmem:[%s1 + $0xb98] sm:$0xff]
    %v414 = vld [vmem:[%s1 + $0xba0] sm:$0xff]
    %v415 = vld [vmem:[%s1 + $0xba8] sm:$0xff]
    %v416 = vld [vmem:[%s1 + $0xbb0] sm:$0xff]
    %v417 = vld [vmem:[%s1 + $0xbb8] sm:$0xff]
    %v418 = vld [vmem:[%s1 + $0xbc0] sm:$0xff]
    %v419 = vld [vmem:[%s1 + $0xbc8] sm:$0xff]
    %v420 = vld [vmem:[%s1 + $0xbd0] sm:$0xff]
    %v421 = vld [vmem:[%s1 + $0xbd8] sm:$0xff]
    %v422 = vld [vmem:[%s1 + $0xbe0] sm:$0xff]
    %v423 = vld [vmem:[%s1 + $0xbe8] sm:$0xff]
    %v424 = vld [vmem:[%s1 + $0xbf0] sm:$0xff]
    %v425 = vld [vmem:[%s1 + $0xbf8] sm:$0xff]
    %v426 = vld [vmem:[%s1 + $0xc00] sm:$0xff]
    %v427 = vld [vmem:[%s1 + $0xc08] sm:$0xff]
    %v428 = vld [vmem:[%s1 + $0xc10] sm:$0xff]
    %v429 = vld [vmem:[%s1 + $0xc18] sm:$0xff]
    %v430 = vld [vmem:[%s1 + $0xc20] sm:$0xff]
    %v431 = vld [vmem:[%s1 + $0xc28] sm:$0xff]
    %v432 = vld [vmem:[%s1 + $0xc30] sm:$0xff]
    %v433 = vld [vmem:[%s1 + $0xc38] sm:$0xff]
    %v434 = vld [vmem:[%s1 + $0xc40] sm:$0xff]
    %v435 = vld [vmem:[%s1 + $0xc48] sm:$0xff]
    %v436 = vld [vmem:[%s1 + $0xc50] sm:$0xff]
    %v437 = vld [vmem:[%s1 + $0xc58] sm:$0xff]
    %v438 = vld [vmem:[%s1 + $0xc60] sm:$0xff]
    %v439 = vld [vmem:[%s1 + $0xc68] sm:$0xff]
    %v440 = vld [vmem:[%s1 + $0xc70] sm:$0xff]
    %v441 = vld [vmem:[%s1 + $0xc78] sm:$0xff]
    %v442 = vld [vmem:[%s1 + $0xc80] sm:$0xff]
    %v443 = vld [vmem:[%s1 + $0xc88] sm:$0xff]
    %v444 = vld [vmem:[%s1 + $0xc90] sm:$0xff]
    %v445 = vld [vmem:[%s1 + $0xc98] sm:$0xff]
    %v446 = vld [vmem:[%s1 + $0xca0] sm:$0xff]
    %v447 = vld [vmem:[%s1 + $0xca8] sm:$0xff]
    %v448 = vld [vmem:[%s1 + $0xcb0] sm:$0xff]
    %v449 = vld [vmem:[%s1 + $0xcb8] sm:$0xff]
    %v450 = vld [vmem:[%s1 + $0xcc0] sm:$0xff]
    %v451 = vld [vmem:[%s1 + $0xcc8] sm:$0xff]
    %v452 = vld [vmem:[%s1 + $0xcd0] sm:$0xff]
    %v453 = vld [vmem:[%s1 + $0xcd8] sm:$0xff]
    %v454 = vld [vmem:[%s1 + $0xce0] sm:$0xff]
    %v455 = vld [vmem:[%s1 + $0xce8] sm:$0xff]
    %v456 = vld [vmem:[%s1 + $0xcf0] sm:$0xff]
    %v457 = vld [vmem:[%s1 + $0xcf8] sm:$0xff]
    %v458 = vld [vmem:[%s1 + $0xd00] sm:$0xff]
    %v459 = vld [vmem:[%s1 + $0xd08] sm:$0xff]
    %v460 = vld [vmem:[%s1 + $0xd10] sm:$0xff]
    %v461 = vld [vmem:[%s1 + $0xd18] sm:$0xff]
    %v462 = vld [vmem:[%s1 + $0xd20] sm:$0xff]
    %v463 = vld [vmem:[%s1 + $0xd28] sm:$0xff]
    %v464 = vld [vmem:[%s1 + $0xd30] sm:$0xff]
    %v465 = vld [vmem:[%s1 + $0xd38] sm:$0xff]
    %v466 = vld [vmem:[%s1 + $0xd40] sm:$0xff]
    %v467 = vld [vmem:[%s1 + $0xd48] sm:$0xff]
    %v468 = vld [vmem:[%s1 + $0xd50] sm:$0xff]
    %v469 = vld [vmem:[%s1 + $0xd58] sm:$0xff]
    %v470 = vld [vmem:[%s1 + $0xd60] sm:$0xff]
    %v471 = vld [vmem:[%s1 + $0xd68] sm:$0xff]
    %v472 = vld [vmem:[%s1 + $0xd70] sm:$0xff]
    %v473 = vld [vmem:[%s1 + $0xd78] sm:$0xff]
    %v474 = vld [vmem:[%s2] sm:$0x7]
    %v476 = vperm.slane %v474, 0
    %v477 = vperm.slane %v474, 1
    %v478 = vperm.slane %v474, 2
    %482 = vmatpush.msra.mxu0 %v87
    %483 = vmatpush.msra.mxu0 %v84
    %484 = vmatpush.msra.mxu0 %v81
    %485 = vmatpush.msra.mxu0 %v78
    %486 = vmatpush.msra.mxu0 %v75
    %487 = vmatpush.msra.mxu0 %v72
    %488 = vmatpush.msra.mxu0 %v69
    %489 = vmatpush.msra.mxu0 %v66
    %490 = vmatpush.msra.mxu0 %v63
    %491 = vmatpush.msra.mxu0 %v60
    %492 = vmatpush.msra.mxu0 %v57
    %493 = vmatpush.msra.mxu0 %v54
    %494 = vmatpush.msra.mxu0 %v51
    %495 = vmatpush.msra.mxu0 %v48
    %496 = vmatpush.msra.mxu0 %v45
    %497 = vmatpush.msra.mxu0 %v42
    %498 = vmatmul.f32.gmra.mxu0 %v33
    %v499 = vpop.f32.mrf.mxu0
    %v500 = vadd.f32 %v476, %v499
    %501 = vdwg.mxu0
    %502 = vmatpush.msra.mxu0 %v135
    %503 = vmatpush.msra.mxu0 %v132
    %504 = vmatpush.msra.mxu0 %v129
    %505 = vmatpush.msra.mxu0 %v126
    %506 = vmatpush.msra.mxu0 %v123
    %507 = vmatpush.msra.mxu0 %v120
    %508 = vmatpush.msra.mxu0 %v117
    %509 = vmatpush.msra.mxu0 %v114
    %510 = vmatpush.msra.mxu0 %v111
    %511 = vmatpush.msra.mxu0 %v108
    %512 = vmatpush.msra.mxu0 %v105
    %513 = vmatpush.msra.mxu0 %v102
    %514 = vmatpush.msra.mxu0 %v99
    %515 = vmatpush.msra.mxu0 %v96
    %516 = vmatpush.msra.mxu0 %v93
    %517 = vmatpush.msra.mxu0 %v90
    %518 = vmatmul.f32.gmra.mxu0 %v34
    %v519 = vpop.f32.mrf.mxu0
    %v520 = vadd.f32 %v500, %v519
    %521 = vdwg.mxu0
    %522 = vmatpush.msra.mxu0 %v183
    %523 = vmatpush.msra.mxu0 %v180
    %524 = vmatpush.msra.mxu0 %v177
    %525 = vmatpush.msra.mxu0 %v174
    %526 = vmatpush.msra.mxu0 %v171
    %527 = vmatpush.msra.mxu0 %v168
    %528 = vmatpush.msra.mxu0 %v165
    %529 = vmatpush.msra.mxu0 %v162
    %530 = vmatpush.msra.mxu0 %v159
    %531 = vmatpush.msra.mxu0 %v156
    %532 = vmatpush.msra.mxu0 %v153
    %533 = vmatpush.msra.mxu0 %v150
    %534 = vmatpush.msra.mxu0 %v147
    %535 = vmatpush.msra.mxu0 %v144
    %536 = vmatpush.msra.mxu0 %v141
    %537 = vmatpush.msra.mxu0 %v138
    %538 = vmatmul.f32.gmra.mxu0 %v35
    %v539 = vpop.f32.mrf.mxu0
    %v540 = vadd.f32 %v520, %v539
    %541 = vdwg.mxu0
    %542 = vmatpush.msra.mxu0 %v231
    %543 = vmatpush.msra.mxu0 %v228
    %544 = vmatpush.msra.mxu0 %v225
    %545 = vmatpush.msra.mxu0 %v222
    %546 = vmatpush.msra.mxu0 %v219
    %547 = vmatpush.msra.mxu0 %v216
    %548 = vmatpush.msra.mxu0 %v213
    %549 = vmatpush.msra.mxu0 %v210
    %550 = vmatpush.msra.mxu0 %v207
    %551 = vmatpush.msra.mxu0 %v204
    %552 = vmatpush.msra.mxu0 %v201
    %553 = vmatpush.msra.mxu0 %v198
    %554 = vmatpush.msra.mxu0 %v195
    %555 = vmatpush.msra.mxu0 %v192
    %556 = vmatpush.msra.mxu0 %v189
    %557 = vmatpush.msra.mxu0 %v186
    %558 = vmatmul.f32.gmra.mxu0 %v36
    %v559 = vpop.f32.mrf.mxu0
    %v560 = vadd.f32 %v540, %v559
    %561 = vdwg.mxu0
    %562 = vmatpush.msra.mxu0 %v279
    %563 = vmatpush.msra.mxu0 %v276
    %564 = vmatpush.msra.mxu0 %v273
    %565 = vmatpush.msra.mxu0 %v270
    %566 = vmatpush.msra.mxu0 %v267
    %567 = vmatpush.msra.mxu0 %v264
    %568 = vmatpush.msra.mxu0 %v261
    %569 = vmatpush.msra.mxu0 %v258
    %570 = vmatpush.msra.mxu0 %v255
    %571 = vmatpush.msra.mxu0 %v252
    %572 = vmatpush.msra.mxu0 %v249
    %573 = vmatpush.msra.mxu0 %v246
    %574 = vmatpush.msra.mxu0 %v243
    %575 = vmatpush.msra.mxu0 %v240
    %576 = vmatpush.msra.mxu0 %v237
    %577 = vmatpush.msra.mxu0 %v234
    %578 = vmatmul.f32.gmra.mxu0 %v37
    %v579 = vpop.f32.mrf.mxu0
    %v580 = vadd.f32 %v560, %v579
    %581 = vdwg.mxu0
    %582 = vmatpush.msra.mxu0 %v327
    %583 = vmatpush.msra.mxu0 %v324
    %584 = vmatpush.msra.mxu0 %v321
    %585 = vmatpush.msra.mxu0 %v318
    %586 = vmatpush.msra.mxu0 %v315
    %587 = vmatpush.msra.mxu0 %v312
    %588 = vmatpush.msra.mxu0 %v309
    %589 = vmatpush.msra.mxu0 %v306
    %590 = vmatpush.msra.mxu0 %v303
    %591 = vmatpush.msra.mxu0 %v300
    %592 = vmatpush.msra.mxu0 %v297
    %593 = vmatpush.msra.mxu0 %v294
    %594 = vmatpush.msra.mxu0 %v291
    %595 = vmatpush.msra.mxu0 %v288
    %596 = vmatpush.msra.mxu0 %v285
    %597 = vmatpush.msra.mxu0 %v282
    %598 = vmatmul.f32.gmra.mxu0 %v38
    %v599 = vpop.f32.mrf.mxu0
    %v600 = vadd.f32 %v580, %v599
    %601 = vdwg.mxu0
    %602 = vmatpush.msra.mxu0 %v375
    %603 = vmatpush.msra.mxu0 %v372
    %604 = vmatpush.msra.mxu0 %v369
    %605 = vmatpush.msra.mxu0 %v366
    %606 = vmatpush.msra.mxu0 %v363
    %607 = vmatpush.msra.mxu0 %v360
    %608 = vmatpush.msra.mxu0 %v357
    %609 = vmatpush.msra.mxu0 %v354
    %610 = vmatpush.msra.mxu0 %v351
    %611 = vmatpush.msra.mxu0 %v348
    %612 = vmatpush.msra.mxu0 %v345
    %613 = vmatpush.msra.mxu0 %v342
    %614 = vmatpush.msra.mxu0 %v339
    %615 = vmatpush.msra.mxu0 %v336
    %616 = vmatpush.msra.mxu0 %v333
    %617 = vmatpush.msra.mxu0 %v330
    %618 = vmatmul.f32.gmra.mxu0 %v39
    %v619 = vpop.f32.mrf.mxu0
    %v620 = vadd.f32 %v600, %v619
    %621 = vdwg.mxu0
    %622 = vmatpush.msra.mxu0 %v423
    %623 = vmatpush.msra.mxu0 %v420
    %624 = vmatpush.msra.mxu0 %v417
    %625 = vmatpush.msra.mxu0 %v414
    %626 = vmatpush.msra.mxu0 %v411
    %627 = vmatpush.msra.mxu0 %v408
    %628 = vmatpush.msra.mxu0 %v405
    %629 = vmatpush.msra.mxu0 %v402
    %630 = vmatpush.msra.mxu0 %v399
    %631 = vmatpush.msra.mxu0 %v396
    %632 = vmatpush.msra.mxu0 %v393
    %633 = vmatpush.msra.mxu0 %v390
    %634 = vmatpush.msra.mxu0 %v387
    %635 = vmatpush.msra.mxu0 %v384
    %636 = vmatpush.msra.mxu0 %v381
    %637 = vmatpush.msra.mxu0 %v378
    %638 = vmatmul.f32.gmra.mxu0 %v40
    %v639 = vpop.f32.mrf.mxu0
    %v640 = vadd.f32 %v620, %v639
    %641 = vdwg.mxu0
    %642 = vmatpush.msra.mxu0 %v471
    %643 = vmatpush.msra.mxu0 %v468
    %644 = vmatpush.msra.mxu0 %v465
    %645 = vmatpush.msra.mxu0 %v462
    %646 = vmatpush.msra.mxu0 %v459
    %647 = vmatpush.msra.mxu0 %v456
    %648 = vmatpush.msra.mxu0 %v453
    %649 = vmatpush.msra.mxu0 %v450
    %650 = vmatpush.msra.mxu0 %v447
    %651 = vmatpush.msra.mxu0 %v444
    %652 = vmatpush.msra.mxu0 %v441
    %653 = vmatpush.msra.mxu0 %v438
    %654 = vmatpush.msra.mxu0 %v435
    %655 = vmatpush.msra.mxu0 %v432
    %656 = vmatpush.msra.mxu0 %v429
    %657 = vmatpush.msra.mxu0 %v426
    %658 = vmatmul.f32.gmra.mxu0 %v41
    %v659 = vpop.f32.mrf.mxu0
    %v660 = vadd.f32 %v640, %v659
    %661 = vdwg.mxu0
    %662 = vmatpush.msra.mxu0 %v88
    %663 = vmatpush.msra.mxu0 %v85
    %664 = vmatpush.msra.mxu0 %v82
    %665 = vmatpush.msra.mxu0 %v79
    %666 = vmatpush.msra.mxu0 %v76
    %667 = vmatpush.msra.mxu0 %v73
    %668 = vmatpush.msra.mxu0 %v70
    %669 = vmatpush.msra.mxu0 %v67
    %670 = vmatpush.msra.mxu0 %v64
    %671 = vmatpush.msra.mxu0 %v61
    %672 = vmatpush.msra.mxu0 %v58
    %673 = vmatpush.msra.mxu0 %v55
    %674 = vmatpush.msra.mxu0 %v52
    %675 = vmatpush.msra.mxu0 %v49
    %676 = vmatpush.msra.mxu0 %v46
    %677 = vmatpush.msra.mxu0 %v43
    %678 = vmatmul.f32.gmra.mxu0 %v33
    %v679 = vpop.f32.mrf.mxu0
    %v680 = vadd.f32 %v477, %v679
    %681 = vdwg.mxu0
    %682 = vmatpush.msra.mxu0 %v136
    %683 = vmatpush.msra.mxu0 %v133
    %684 = vmatpush.msra.mxu0 %v130
    %685 = vmatpush.msra.mxu0 %v127
    %686 = vmatpush.msra.mxu0 %v124
    %687 = vmatpush.msra.mxu0 %v121
    %688 = vmatpush.msra.mxu0 %v118
    %689 = vmatpush.msra.mxu0 %v115
    %690 = vmatpush.msra.mxu0 %v112
    %691 = vmatpush.msra.mxu0 %v109
    %692 = vmatpush.msra.mxu0 %v106
    %693 = vmatpush.msra.mxu0 %v103
    %694 = vmatpush.msra.mxu0 %v100
    %695 = vmatpush.msra.mxu0 %v97
    %696 = vmatpush.msra.mxu0 %v94
    %697 = vmatpush.msra.mxu0 %v91
    %698 = vmatmul.f32.gmra.mxu0 %v34
    %v699 = vpop.f32.mrf.mxu0
    %v700 = vadd.f32 %v680, %v699
    %701 = vdwg.mxu0
    %702 = vmatpush.msra.mxu0 %v184
    %703 = vmatpush.msra.mxu0 %v181
    %704 = vmatpush.msra.mxu0 %v178
    %705 = vmatpush.msra.mxu0 %v175
    %706 = vmatpush.msra.mxu0 %v172
    %707 = vmatpush.msra.mxu0 %v169
    %708 = vmatpush.msra.mxu0 %v166
    %709 = vmatpush.msra.mxu0 %v163
    %710 = vmatpush.msra.mxu0 %v160
    %711 = vmatpush.msra.mxu0 %v157
    %712 = vmatpush.msra.mxu0 %v154
    %713 = vmatpush.msra.mxu0 %v151
    %714 = vmatpush.msra.mxu0 %v148
    %715 = vmatpush.msra.mxu0 %v145
    %716 = vmatpush.msra.mxu0 %v142
    %717 = vmatpush.msra.mxu0 %v139
    %718 = vmatmul.f32.gmra.mxu0 %v35
    %v719 = vpop.f32.mrf.mxu0
    %v720 = vadd.f32 %v700, %v719
    %721 = vdwg.mxu0
    %722 = vmatpush.msra.mxu0 %v232
    %723 = vmatpush.msra.mxu0 %v229
    %724 = vmatpush.msra.mxu0 %v226
    %725 = vmatpush.msra.mxu0 %v223
    %726 = vmatpush.msra.mxu0 %v220
    %727 = vmatpush.msra.mxu0 %v217
    %728 = vmatpush.msra.mxu0 %v214
    %729 = vmatpush.msra.mxu0 %v211
    %730 = vmatpush.msra.mxu0 %v208
    %731 = vmatpush.msra.mxu0 %v205
    %732 = vmatpush.msra.mxu0 %v202
    %733 = vmatpush.msra.mxu0 %v199
    %734 = vmatpush.msra.mxu0 %v196
    %735 = vmatpush.msra.mxu0 %v193
    %736 = vmatpush.msra.mxu0 %v190
    %737 = vmatpush.msra.mxu0 %v187
    %738 = vmatmul.f32.gmra.mxu0 %v36
    %v739 = vpop.f32.mrf.mxu0
    %v740 = vadd.f32 %v720, %v739
    %741 = vdwg.mxu0
    %742 = vmatpush.msra.mxu0 %v280
    %743 = vmatpush.msra.mxu0 %v277
    %744 = vmatpush.msra.mxu0 %v274
    %745 = vmatpush.msra.mxu0 %v271
    %746 = vmatpush.msra.mxu0 %v268
    %747 = vmatpush.msra.mxu0 %v265
    %748 = vmatpush.msra.mxu0 %v262
    %749 = vmatpush.msra.mxu0 %v259
    %750 = vmatpush.msra.mxu0 %v256
    %751 = vmatpush.msra.mxu0 %v253
    %752 = vmatpush.msra.mxu0 %v250
    %753 = vmatpush.msra.mxu0 %v247
    %754 = vmatpush.msra.mxu0 %v244
    %755 = vmatpush.msra.mxu0 %v241
    %756 = vmatpush.msra.mxu0 %v238
    %757 = vmatpush.msra.mxu0 %v235
    %758 = vmatmul.f32.gmra.mxu0 %v37
    %v759 = vpop.f32.mrf.mxu0
    %v760 = vadd.f32 %v740, %v759
    %761 = vdwg.mxu0
    %762 = vmatpush.msra.mxu0 %v328
    %763 = vmatpush.msra.mxu0 %v325
    %764 = vmatpush.msra.mxu0 %v322
    %765 = vmatpush.msra.mxu0 %v319
    %766 = vmatpush.msra.mxu0 %v316
    %767 = vmatpush.msra.mxu0 %v313
    %768 = vmatpush.msra.mxu0 %v310
    %769 = vmatpush.msra.mxu0 %v307
    %770 = vmatpush.msra.mxu0 %v304
    %771 = vmatpush.msra.mxu0 %v301
    %772 = vmatpush.msra.mxu0 %v298
    %773 = vmatpush.msra.mxu0 %v295
    %774 = vmatpush.msra.mxu0 %v292
    %775 = vmatpush.msra.mxu0 %v289
    %776 = vmatpush.msra.mxu0 %v286
    %777 = vmatpush.msra.mxu0 %v283
    %778 = vmatmul.f32.gmra.mxu0 %v38
    %v779 = vpop.f32.mrf.mxu0
    %v780 = vadd.f32 %v760, %v779
    %781 = vdwg.mxu0
    %782 = vmatpush.msra.mxu0 %v376
    %783 = vmatpush.msra.mxu0 %v373
    %784 = vmatpush.msra.mxu0 %v370
    %785 = vmatpush.msra.mxu0 %v367
    %786 = vmatpush.msra.mxu0 %v364
    %787 = vmatpush.msra.mxu0 %v361
    %788 = vmatpush.msra.mxu0 %v358
    %789 = vmatpush.msra.mxu0 %v355
    %790 = vmatpush.msra.mxu0 %v352
    %791 = vmatpush.msra.mxu0 %v349
    %792 = vmatpush.msra.mxu0 %v346
    %793 = vmatpush.msra.mxu0 %v343
    %794 = vmatpush.msra.mxu0 %v340
    %795 = vmatpush.msra.mxu0 %v337
    %796 = vmatpush.msra.mxu0 %v334
    %797 = vmatpush.msra.mxu0 %v331
    %798 = vmatmul.f32.gmra.mxu0 %v39
    %v799 = vpop.f32.mrf.mxu0
    %v800 = vadd.f32 %v780, %v799
    %801 = vdwg.mxu0
    %802 = vmatpush.msra.mxu0 %v424
    %803 = vmatpush.msra.mxu0 %v421
    %804 = vmatpush.msra.mxu0 %v418
    %805 = vmatpush.msra.mxu0 %v415
    %806 = vmatpush.msra.mxu0 %v412
    %807 = vmatpush.msra.mxu0 %v409
    %808 = vmatpush.msra.mxu0 %v406
    %809 = vmatpush.msra.mxu0 %v403
    %810 = vmatpush.msra.mxu0 %v400
    %811 = vmatpush.msra.mxu0 %v397
    %812 = vmatpush.msra.mxu0 %v394
    %813 = vmatpush.msra.mxu0 %v391
    %814 = vmatpush.msra.mxu0 %v388
    %815 = vmatpush.msra.mxu0 %v385
    %816 = vmatpush.msra.mxu0 %v382
    %817 = vmatpush.msra.mxu0 %v379
    %818 = vmatmul.f32.gmra.mxu0 %v40
    %v819 = vpop.f32.mrf.mxu0
    %v820 = vadd.f32 %v800, %v819
    %821 = vdwg.mxu0
    %822 = vmatpush.msra.mxu0 %v472
    %823 = vmatpush.msra.mxu0 %v469
    %824 = vmatpush.msra.mxu0 %v466
    %825 = vmatpush.msra.mxu0 %v463
    %826 = vmatpush.msra.mxu0 %v460
    %827 = vmatpush.msra.mxu0 %v457
    %828 = vmatpush.msra.mxu0 %v454
    %829 = vmatpush.msra.mxu0 %v451
    %830 = vmatpush.msra.mxu0 %v448
    %831 = vmatpush.msra.mxu0 %v445
    %832 = vmatpush.msra.mxu0 %v442
    %833 = vmatpush.msra.mxu0 %v439
    %834 = vmatpush.msra.mxu0 %v436
    %835 = vmatpush.msra.mxu0 %v433
    %836 = vmatpush.msra.mxu0 %v430
    %837 = vmatpush.msra.mxu0 %v427
    %838 = vmatmul.f32.gmra.mxu0 %v41
    %v839 = vpop.f32.mrf.mxu0
    %v840 = vadd.f32 %v820, %v839
    %841 = vdwg.mxu0
    %842 = vmatpush.msra.mxu0 %v89
    %843 = vmatpush.msra.mxu0 %v86
    %844 = vmatpush.msra.mxu0 %v83
    %845 = vmatpush.msra.mxu0 %v80
    %846 = vmatpush.msra.mxu0 %v77
    %847 = vmatpush.msra.mxu0 %v74
    %848 = vmatpush.msra.mxu0 %v71
    %849 = vmatpush.msra.mxu0 %v68
    %850 = vmatpush.msra.mxu0 %v65
    %851 = vmatpush.msra.mxu0 %v62
    %852 = vmatpush.msra.mxu0 %v59
    %853 = vmatpush.msra.mxu0 %v56
    %854 = vmatpush.msra.mxu0 %v53
    %855 = vmatpush.msra.mxu0 %v50
    %856 = vmatpush.msra.mxu0 %v47
    %857 = vmatpush.msra.mxu0 %v44
    %858 = vmatmul.f32.gmra.mxu0 %v33
    %v859 = vpop.f32.mrf.mxu0
    %v860 = vadd.f32 %v478, %v859
    %861 = vdwg.mxu0
    %862 = vmatpush.msra.mxu0 %v137
    %863 = vmatpush.msra.mxu0 %v134
    %864 = vmatpush.msra.mxu0 %v131
    %865 = vmatpush.msra.mxu0 %v128
    %866 = vmatpush.msra.mxu0 %v125
    %867 = vmatpush.msra.mxu0 %v122
    %868 = vmatpush.msra.mxu0 %v119
    %869 = vmatpush.msra.mxu0 %v116
    %870 = vmatpush.msra.mxu0 %v113
    %871 = vmatpush.msra.mxu0 %v110
    %872 = vmatpush.msra.mxu0 %v107
    %873 = vmatpush.msra.mxu0 %v104
    %874 = vmatpush.msra.mxu0 %v101
    %875 = vmatpush.msra.mxu0 %v98
    %876 = vmatpush.msra.mxu0 %v95
    %877 = vmatpush.msra.mxu0 %v92
    %878 = vmatmul.f32.gmra.mxu0 %v34
    %v879 = vpop.f32.mrf.mxu0
    %v880 = vadd.f32 %v860, %v879
    %881 = vdwg.mxu0
    %882 = vmatpush.msra.mxu0 %v185
    %883 = vmatpush.msra.mxu0 %v182
    %884 = vmatpush.msra.mxu0 %v179
    %885 = vmatpush.msra.mxu0 %v176
    %886 = vmatpush.msra.mxu0 %v173
    %887 = vmatpush.msra.mxu0 %v170
    %888 = vmatpush.msra.mxu0 %v167
    %889 = vmatpush.msra.mxu0 %v164
    %890 = vmatpush.msra.mxu0 %v161
    %891 = vmatpush.msra.mxu0 %v158
    %892 = vmatpush.msra.mxu0 %v155
    %893 = vmatpush.msra.mxu0 %v152
    %894 = vmatpush.msra.mxu0 %v149
    %895 = vmatpush.msra.mxu0 %v146
    %896 = vmatpush.msra.mxu0 %v143
    %897 = vmatpush.msra.mxu0 %v140
    %898 = vmatmul.f32.gmra.mxu0 %v35
    %v899 = vpop.f32.mrf.mxu0
    %v900 = vadd.f32 %v880, %v899
    %901 = vdwg.mxu0
    %902 = vmatpush.msra.mxu0 %v233
    %903 = vmatpush.msra.mxu0 %v230
    %904 = vmatpush.msra.mxu0 %v227
    %905 = vmatpush.msra.mxu0 %v224
    %906 = vmatpush.msra.mxu0 %v221
    %907 = vmatpush.msra.mxu0 %v218
    %908 = vmatpush.msra.mxu0 %v215
    %909 = vmatpush.msra.mxu0 %v212
    %910 = vmatpush.msra.mxu0 %v209
    %911 = vmatpush.msra.mxu0 %v206
    %912 = vmatpush.msra.mxu0 %v203
    %913 = vmatpush.msra.mxu0 %v200
    %914 = vmatpush.msra.mxu0 %v197
    %915 = vmatpush.msra.mxu0 %v194
    %916 = vmatpush.msra.mxu0 %v191
    %917 = vmatpush.msra.mxu0 %v188
    %918 = vmatmul.f32.gmra.mxu0 %v36
    %v919 = vpop.f32.mrf.mxu0
    %v920 = vadd.f32 %v900, %v919
    %921 = vdwg.mxu0
    %922 = vmatpush.msra.mxu0 %v281
    %923 = vmatpush.msra.mxu0 %v278
    %924 = vmatpush.msra.mxu0 %v275
    %925 = vmatpush.msra.mxu0 %v272
    %926 = vmatpush.msra.mxu0 %v269
    %927 = vmatpush.msra.mxu0 %v266
    %928 = vmatpush.msra.mxu0 %v263
    %929 = vmatpush.msra.mxu0 %v260
    %930 = vmatpush.msra.mxu0 %v257
    %931 = vmatpush.msra.mxu0 %v254
    %932 = vmatpush.msra.mxu0 %v251
    %933 = vmatpush.msra.mxu0 %v248
    %934 = vmatpush.msra.mxu0 %v245
    %935 = vmatpush.msra.mxu0 %v242
    %936 = vmatpush.msra.mxu0 %v239
    %937 = vmatpush.msra.mxu0 %v236
    %938 = vmatmul.f32.gmra.mxu0 %v37
    %v939 = vpop.f32.mrf.mxu0
    %v940 = vadd.f32 %v920, %v939
    %941 = vdwg.mxu0
    %942 = vmatpush.msra.mxu0 %v329
    %943 = vmatpush.msra.mxu0 %v326
    %944 = vmatpush.msra.mxu0 %v323
    %945 = vmatpush.msra.mxu0 %v320
    %946 = vmatpush.msra.mxu0 %v317
    %947 = vmatpush.msra.mxu0 %v314
    %948 = vmatpush.msra.mxu0 %v311
    %949 = vmatpush.msra.mxu0 %v308
    %950 = vmatpush.msra.mxu0 %v305
    %951 = vmatpush.msra.mxu0 %v302
    %952 = vmatpush.msra.mxu0 %v299
    %953 = vmatpush.msra.mxu0 %v296
    %954 = vmatpush.msra.mxu0 %v293
    %955 = vmatpush.msra.mxu0 %v290
    %956 = vmatpush.msra.mxu0 %v287
    %957 = vmatpush.msra.mxu0 %v284
    %958 = vmatmul.f32.gmra.mxu0 %v38
    %v959 = vpop.f32.mrf.mxu0
    %v960 = vadd.f32 %v940, %v959
    %961 = vdwg.mxu0
    %962 = vmatpush.msra.mxu0 %v377
    %963 = vmatpush.msra.mxu0 %v374
    %964 = vmatpush.msra.mxu0 %v371
    %965 = vmatpush.msra.mxu0 %v368
    %966 = vmatpush.msra.mxu0 %v365
    %967 = vmatpush.msra.mxu0 %v362
    %968 = vmatpush.msra.mxu0 %v359
    %969 = vmatpush.msra.mxu0 %v356
    %970 = vmatpush.msra.mxu0 %v353
    %971 = vmatpush.msra.mxu0 %v350
    %972 = vmatpush.msra.mxu0 %v347
    %973 = vmatpush.msra.mxu0 %v344
    %974 = vmatpush.msra.mxu0 %v341
    %975 = vmatpush.msra.mxu0 %v338
    %976 = vmatpush.msra.mxu0 %v335
    %977 = vmatpush.msra.mxu0 %v332
    %978 = vmatmul.f32.gmra.mxu0 %v39
    %v979 = vpop.f32.mrf.mxu0
    %v980 = vadd.f32 %v960, %v979
    %981 = vdwg.mxu0
    %982 = vmatpush.msra.mxu0 %v425
    %983 = vmatpush.msra.mxu0 %v422
    %984 = vmatpush.msra.mxu0 %v419
    %985 = vmatpush.msra.mxu0 %v416
    %986 = vmatpush.msra.mxu0 %v413
    %987 = vmatpush.msra.mxu0 %v410
    %988 = vmatpush.msra.mxu0 %v407
    %989 = vmatpush.msra.mxu0 %v404
    %990 = vmatpush.msra.mxu0 %v401
    %991 = vmatpush.msra.mxu0 %v398
    %992 = vmatpush.msra.mxu0 %v395
    %993 = vmatpush.msra.mxu0 %v392
    %994 = vmatpush.msra.mxu0 %v389
    %995 = vmatpush.msra.mxu0 %v386
    %996 = vmatpush.msra.mxu0 %v383
    %997 = vmatpush.msra.mxu0 %v380
    %998 = vmatmul.f32.gmra.mxu0 %v40
    %v999 = vpop.f32.mrf.mxu0
    %v1000 = vadd.f32 %v980, %v999
    %1001 = vdwg.mxu0
    %1002 = vmatpush.msra.mxu0 %v473
    %1003 = vmatpush.msra.mxu0 %v470
    %1004 = vmatpush.msra.mxu0 %v467
    %1005 = vmatpush.msra.mxu0 %v464
    %1006 = vmatpush.msra.mxu0 %v461
    %1007 = vmatpush.msra.mxu0 %v458
    %1008 = vmatpush.msra.mxu0 %v455
    %1009 = vmatpush.msra.mxu0 %v452
    %1010 = vmatpush.msra.mxu0 %v449
    %1011 = vmatpush.msra.mxu0 %v446
    %1012 = vmatpush.msra.mxu0 %v443
    %1013 = vmatpush.msra.mxu0 %v440
    %1014 = vmatpush.msra.mxu0 %v437
    %1015 = vmatpush.msra.mxu0 %v434
    %1016 = vmatpush.msra.mxu0 %v431
    %1017 = vmatpush.msra.mxu0 %v428
    %1018 = vmatmul.f32.gmra.mxu0 %v41
    %v1019 = vpop.f32.mrf.mxu0
    %v1020 = vadd.f32 %v1000, %v1019
    %1021 = vdwg.mxu0
    %v1022 = vmax.f32 %v660, 0.0
    %v1023 = vmax.f32 %v840, 0.0
    %v1024 = vmax.f32 %v1020, 0.0
    %v1025 = vld [vmem:[%s3] sm:$0xff]
    %v1026 = vld [vmem:[%s3 + $0x8] sm:$0xff]
    %v1027 = vld [vmem:[%s3 + $0x10] sm:$0xff]
    %v1028 = vld [vmem:[%s3 + $0x18] sm:$0xff]
    %v1029 = vld [vmem:[%s3 + $0x20] sm:$0xff]
    %v1030 = vld [vmem:[%s3 + $0x28] sm:$0xff]
    %v1031 = vld [vmem:[%s3 + $0x30] sm:$0xff]
    %v1032 = vld [vmem:[%s3 + $0x38] sm:$0xff]
    %v1033 = vld [vmem:[%s3 + $0x40] sm:$0xff]
    %v1034 = vld [vmem:[%s3 + $0x48] sm:$0xff]
    %v1035 = vld [vmem:[%s3 + $0x50] sm:$0xff]
    %v1036 = vld [vmem:[%s3 + $0x58] sm:$0xff]
    %v1037 = vld [vmem:[%s3 + $0x60] sm:$0xff]
    %v1038 = vld [vmem:[%s3 + $0x68] sm:$0xff]
    %v1039 = vld [vmem:[%s3 + $0x70] sm:$0xff]
    %v1040 = vld [vmem:[%s3 + $0x78] sm:$0xff]
    %v1041 = vld [vmem:[%s3 + $0x80] sm:$0xff]
    %v1042 = vld [vmem:[%s3 + $0x88] sm:$0xff]
    %v1043 = vld [vmem:[%s3 + $0x90] sm:$0xff]
    %v1044 = vld [vmem:[%s3 + $0x98] sm:$0xff]
    %v1045 = vld [vmem:[%s3 + $0xa0] sm:$0xff]
    %v1046 = vld [vmem:[%s3 + $0xa8] sm:$0xff]
    %v1047 = vld [vmem:[%s3 + $0xb0] sm:$0xff]
    %v1048 = vld [vmem:[%s3 + $0xb8] sm:$0xff]
    %v1049 = vld [vmem:[%s3 + $0xc0] sm:$0xff]
    %v1050 = vld [vmem:[%s3 + $0xc8] sm:$0xff]
    %v1051 = vld [vmem:[%s3 + $0xd0] sm:$0xff]
    %v1052 = vld [vmem:[%s3 + $0xd8] sm:$0xff]
    %v1053 = vld [vmem:[%s3 + $0xe0] sm:$0xff]
    %v1054 = vld [vmem:[%s3 + $0xe8] sm:$0xff]
    %v1055 = vld [vmem:[%s3 + $0xf0] sm:$0xff]
    %v1056 = vld [vmem:[%s3 + $0xf8] sm:$0xff]
    %v1057 = vld [vmem:[%s3 + $0x100] sm:$0xff]
    %v1058 = vld [vmem:[%s3 + $0x108] sm:$0xff]
    %v1059 = vld [vmem:[%s3 + $0x110] sm:$0xff]
    %v1060 = vld [vmem:[%s3 + $0x118] sm:$0xff]
    %v1061 = vld [vmem:[%s4] sm:$0x1]
    %v1063 = vperm.slane %v1061, 0
    %vm1065 = vcmask 261120
    %v1067 = vsel %vm1065, %v1024, 0
    %1069 = vmatpush.msra.mxu0 %v1040
    %1070 = vmatpush.msra.mxu0 %v1039
    %1071 = vmatpush.msra.mxu0 %v1038
    %1072 = vmatpush.msra.mxu0 %v1037
    %1073 = vmatpush.msra.mxu0 %v1036
    %1074 = vmatpush.msra.mxu0 %v1035
    %1075 = vmatpush.msra.mxu0 %v1034
    %1076 = vmatpush.msra.mxu0 %v1033
    %1077 = vmatpush.msra.mxu0 %v1032
    %1078 = vmatpush.msra.mxu0 %v1031
    %1079 = vmatpush.msra.mxu0 %v1030
    %1080 = vmatpush.msra.mxu0 %v1029
    %1081 = vmatpush.msra.mxu0 %v1028
    %1082 = vmatpush.msra.mxu0 %v1027
    %1083 = vmatpush.msra.mxu0 %v1026
    %1084 = vmatpush.msra.mxu0 %v1025
    %1085 = vmatmul.f32.gmra.mxu0 %v1022
    %v1086 = vpop.f32.mrf.mxu0
    %v1087 = vadd.f32 %v1063, %v1086
    %1088 = vdwg.mxu0
    %1089 = vmatpush.msra.mxu0 %v1056
    %1090 = vmatpush.msra.mxu0 %v1055
    %1091 = vmatpush.msra.mxu0 %v1054
    %1092 = vmatpush.msra.mxu0 %v1053
    %1093 = vmatpush.msra.mxu0 %v1052
    %1094 = vmatpush.msra.mxu0 %v1051
    %1095 = vmatpush.msra.mxu0 %v1050
    %1096 = vmatpush.msra.mxu0 %v1049
    %1097 = vmatpush.msra.mxu0 %v1048
    %1098 = vmatpush.msra.mxu0 %v1047
    %1099 = vmatpush.msra.mxu0 %v1046
    %1100 = vmatpush.msra.mxu0 %v1045
    %1101 = vmatpush.msra.mxu0 %v1044
    %1102 = vmatpush.msra.mxu0 %v1043
    %1103 = vmatpush.msra.mxu0 %v1042
    %1104 = vmatpush.msra.mxu0 %v1041
    %1105 = vmatmul.f32.gmra.mxu0 %v1023
    %v1106 = vpop.f32.mrf.mxu0
    %v1107 = vadd.f32 %v1087, %v1106
    %1108 = vdwg.mxu0
    %1109 = vmatpush.msra.mxu0 0.0
    %1110 = vmatpush.msra.mxu0 0.0
    %1111 = vmatpush.msra.mxu0 0.0
    %1112 = vmatpush.msra.mxu0 0.0
    %1113 = vmatpush.msra.mxu0 0.0
    %1114 = vmatpush.msra.mxu0 0.0
    %1115 = vmatpush.msra.mxu0 0.0
    %1116 = vmatpush.msra.mxu0 0.0
    %1117 = vmatpush.msra.mxu0 0.0
    %1118 = vmatpush.msra.mxu0 0.0
    %1119 = vmatpush.msra.mxu0 0.0
    %1120 = vmatpush.msra.mxu0 0.0
    %1121 = vmatpush.msra.mxu0 %v1060
    %1122 = vmatpush.msra.mxu0 %v1059
    %1123 = vmatpush.msra.mxu0 %v1058
    %1124 = vmatpush.msra.mxu0 %v1057
    %1125 = vmatmul.f32.gmra.mxu0 %v1067
    %v1126 = vpop.f32.mrf.mxu0
    %v1127 = vadd.f32 %v1107, %v1126
    %1128 = vdwg.mxu0
    %v1129 = vmax.f32 %v1127, 0.0
    %v1130 = vld [vmem:[%s5] sm:$0xff]
    %v1131 = vld [vmem:[%s5 + $0x8] sm:$0xff]
    %v1132 = vld [vmem:[%s5 + $0x10] sm:$0xff]
    %v1133 = vld [vmem:[%s5 + $0x18] sm:$0xff]
    %v1134 = vld [vmem:[%s5 + $0x20] sm:$0xff]
    %v1135 = vld [vmem:[%s5 + $0x28] sm:$0xff]
    %v1136 = vld [vmem:[%s5 + $0x30] sm:$0xff]
    %v1137 = vld [vmem:[%s5 + $0x38] sm:$0xff]
    %v1138 = vld [vmem:[%s5 + $0x40] sm:$0xff]
    %v1139 = vld [vmem:[%s6] sm:$0x1]
    %v1141 = vperm.slane %v1139, 0
    %vm1143 = vcmask 588800
    %v1145 = vsel %vm1143, %v1129, 0
    %1147 = vmatpush.msra.mxu0 0.0
    %1148 = vmatpush.msra.mxu0 0.0
    %1149 = vmatpush.msra.mxu0 0.0
    %1150 = vmatpush.msra.mxu0 0.0
    %1151 = vmatpush.msra.mxu0 0.0
    %1152 = vmatpush.msra.mxu0 0.0
    %1153 = vmatpush.msra.mxu0 0.0
    %1154 = vmatpush.msra.mxu0 %v1138
    %1155 = vmatpush.msra.mxu0 %v1137
    %1156 = vmatpush.msra.mxu0 %v1136
    %1157 = vmatpush.msra.mxu0 %v1135
    %1158 = vmatpush.msra.mxu0 %v1134
    %1159 = vmatpush.msra.mxu0 %v1133
    %1160 = vmatpush.msra.mxu0 %v1132
    %1161 = vmatpush.msra.mxu0 %v1131
    %1162 = vmatpush.msra.mxu0 %v1130
    %1163 = vmatmul.f32.gmra.mxu0 %v1145
    %v1164 = vpop.f32.mrf.mxu0
    %v1165 = vadd.f32 %v1141, %v1164
    %1166 = vdwg.mxu0
    %v1167 = vmax.f32 %v1165, 0.0
    %v1168 = vld [vmem:[%s7] sm:$0xff]
    %v1169 = vld [vmem:[%s7 + $0x8] sm:$0xff]
    %v1170 = vld [vmem:[%s7 + $0x10] sm:$0x3]
    %v1171 = vld [vmem:[%s8] sm:$0x1]
    %v1173 = vperm.slane %v1171, 0
    %vm1175 = vcmask 146432
    %v1177 = vsel %vm1175, %v1167, 0
    %vm1179 = vcmask 1041408
    %v1181 = vsel %vm1179, %v1170, 0
    %1183 = vmatpush.msra.mxu0 0.0
    %1184 = vmatpush.msra.mxu0 0.0
    %1185 = vmatpush.msra.mxu0 0.0
    %1186 = vmatpush.msra.mxu0 0.0
    %1187 = vmatpush.msra.mxu0 0.0
    %1188 = vmatpush.msra.mxu0 0.0
    %1189 = vmatpush.msra.mxu0 0.0
    %1190 = vmatpush.msra.mxu0 0.0
    %1191 = vmatpush.msra.mxu0 0.0
    %1192 = vmatpush.msra.mxu0 0.0
    %1193 = vmatpush.msra.mxu0 0.0
    %1194 = vmatpush.msra.mxu0 0.0
    %1195 = vmatpush.msra.mxu0 0.0
    %1196 = vmatpush.msra.mxu0 %v1181
    %1197 = vmatpush.msra.mxu0 %v1169
    %1198 = vmatpush.msra.mxu0 %v1168
    %1199 = vmatmul.f32.gmra.mxu0 %v1177
    %v1200 = vpop.f32.mrf.mxu0
    %v1201 = vadd.f32 %v1173, %v1200
    %1202 = vdwg.mxu0
    %v1203 = vlaneseq
    %v1204 = vand.u32 %v1203, 127
    %vm1205 = vcmp.eq.s32.totalorder %v1204, 0
    %v1206 = vmax.f32 %v1201, 0.0
    %v1207 = vsel %vm1205, %v1206, %v1201
    %1208 = vst [vmem:[#allocation2] sm:$0xff] %v1207
    // Predicated region
    $region38: #{tpu_custom_call.1} parent=1 // pred_check
      _
    $region39: #{tpu_custom_call.1} parent=1 // pred_check_branch
      %1210 = sbr.rel (0) target = $region41
    $region40: #{tpu_custom_call.1} parent=1 // pred_region
      %1212 = vsyncadd [#allocation3], 0
      %s1214 = sshll.u32 [#allocation2], 4
      %s1215 = int_to_ptr.vmem [resolvable:$true] %s1214
      %s1216 = sshll.u32 %s9, 4
      %s1217 = int_to_ptr.hbm [resolvable:$true] %s1216
      %1219 = dma.vmem_to_hbm [thread:$0]  %s1215, 128, %s1217, [#allocation3]
    $region41: #{tpu_custom_call.1} parent=1 // pred_fallthru
      _
    // Predicated region
    $region42: #{tpu_custom_call.1} parent=1 // pred_check
      _
    $region43: #{tpu_custom_call.1} parent=1 // pred_check_branch
      %1221 = sbr.rel (0) target = $region45
    $region44: #{tpu_custom_call.1} parent=1 // pred_region
      %1223 = dma.done [#allocation3], 128
    $region45: #{tpu_custom_call.1} parent=1 // pred_fallthru
      _
    %1224 = vsyncpa [#allocation3], 1

</llo_original>
